<compile_context>
chip_gen: v7x
topology: tpu7x:2x2x1
jax: 0.10.0
libtpu: 0.0.40
codegen_flags: <defaults>
</compile_context>

<pallas_src>
import jax
import jax.numpy as jnp
from jax.experimental import pallas as pl
from jax.experimental.pallas import tpu as pltpu

_LN_EPS = 1e-5


def _layernorm(h, gamma, beta, eps=_LN_EPS):
    # f32 LN math; one-pass variance: E[h^2] - mu^2 (clamped for numerical safety).
    mu = jnp.mean(h, axis=-1, keepdims=True)
    ms = jnp.mean(h * h, axis=-1, keepdims=True)
    var = jnp.maximum(ms - mu * mu, 0.0)
    return (h - mu) * jax.lax.rsqrt(var + eps) * gamma + beta


def _residual_block_kernel_proj(x_ref, wf_ref, w2_ref, vec_ref, o_ref):
    # vec rows: b1, g1, be1, b2, g2, be2, bp, pad
    vec = vec_ref[...]
    b1, g1, be1 = vec[0:1, :], vec[1:2, :], vec[2:3, :]
    b2, g2, be2 = vec[3:4, :], vec[4:5, :], vec[5:6, :]
    bp = vec[6:7, :]

    D = o_ref.shape[-1]
    x = x_ref[...].astype(jnp.bfloat16)     # cast in-kernel (free on VPU; x streamed as f32)

    # One fused matmul with shared LHS: wf = [wp | w1]  -> (TB, 2*D)
    fused = jnp.dot(x, wf_ref[...], preferred_element_type=jnp.float32)
    residual = fused[:, :D] + bp            # projection(x)
    h = fused[:, D:] + b1                   # fc1(x)

    h = jnp.maximum(_layernorm(h, g1, be1), 0.0)
    # TODO(synk): nn.Dropout(0.1) is identity in eval mode; training-mode RNG mask omitted.

    h = jnp.dot(h.astype(w2_ref.dtype), w2_ref[...], preferred_element_type=jnp.float32) + b2
    h = _layernorm(h, g2, be2) + residual
    o_ref[...] = jnp.maximum(h, 0.0).astype(o_ref.dtype)


def _residual_block_kernel_noproj(x_ref, w1_ref, w2_ref, vec_ref, o_ref):
    vec = vec_ref[...]
    b1, g1, be1 = vec[0:1, :], vec[1:2, :], vec[2:3, :]
    b2, g2, be2 = vec[3:4, :], vec[4:5, :], vec[5:6, :]

    xf = x_ref[...]                          # f32 (TB, D)
    x = xf.astype(jnp.bfloat16)
    residual = xf                            # exact f32 identity skip (no eye-matmul)

    h = jnp.dot(x, w1_ref[...], preferred_element_type=jnp.float32) + b1
    h = jnp.maximum(_layernorm(h, g1, be1), 0.0)
    # TODO(synk): dropout is eval-mode identity here.

    h = jnp.dot(h.astype(w2_ref.dtype), w2_ref[...], preferred_element_type=jnp.float32) + b2
    h = _layernorm(h, g2, be2) + residual
    o_ref[...] = jnp.maximum(h, 0.0).astype(o_ref.dtype)


def residual_block(x, params, *, batch_tile=512, out_dtype=jnp.bfloat16, training=False):
    """x: [B, in_dim] float32. params: see init_params (weights bf16, (in, out) layout)."""
    if training:
        # TODO(synk): training-mode dropout(0.1) RNG mask not implemented in-kernel.
        raise NotImplementedError("Pallas ResidualBlock implements the eval-mode forward only")

    B, in_dim = x.shape
    out_dim = params["w1"].shape[1]
    has_proj = "wp" in params
    if not has_proj:
        assert in_dim == out_dim

    # ---- batch tile: big tiles amortize the ~0.35us/step overhead, but keep enough grid
    # steps (>= ~4 per TensorCore on v7x's 2 TCs) so DMA/compute still overlap for small B.
    TB = min(batch_tile, B)
    if B >= 8:
        while TB > 128 and pl.cdiv(B, TB) < 8:
            TB = max(128, TB // 2)
        TB = max(8, (TB // 8) * 8)           # keep sublane (8) alignment
    grid = (pl.cdiv(B, TB),)
    # NOTE: if B % TB != 0, the padded rows of the last tile run LN/rsqrt on unspecified
    # data; all math here is row-wise and Pallas masks the writeback, so valid rows are
    # unaffected. Do NOT add cross-row reductions without revisiting this.

    # ---- pack per-feature vectors into one (8, out_dim) f32 slab (single resident DMA).
    zero_row = jnp.zeros((1, out_dim), jnp.float32)
    rows = [params["b1"], params["g1"], params["be1"],
            params["b2"], params["g2"], params["be2"],
            params["bp"] if has_proj else zero_row,
            zero_row]
    vecs = jnp.concatenate(rows, axis=0).astype(jnp.float32)

    resident = lambda i: (0, 0)              # constant index_map: DMA'd once, stays in VMEM
    x_spec = pl.BlockSpec((TB, in_dim), lambda i: (i, 0))       # f32 streamed, cast in-kernel
    o_spec = pl.BlockSpec((TB, out_dim), lambda i: (i, 0))
    w2_spec = pl.BlockSpec((out_dim, out_dim), resident)
    vec_spec = pl.BlockSpec((8, out_dim), resident)

    if has_proj:
        # fuse [wp | w1] along N: one matmul with shared LHS x.
        wf = jnp.concatenate([params["wp"], params["w1"]], axis=1)   # (in_dim, 2*out_dim) bf16
        kernel = _residual_block_kernel_proj
        in_specs = [x_spec, pl.BlockSpec((in_dim, 2 * out_dim), resident), w2_spec, vec_spec]
        args = (x, wf, params["w2"], vecs)
        w_bytes = wf.size * 2 + params["w2"].size * 2
        flops = 2 * B * (in_dim * 2 * out_dim + out_dim * out_dim)
    else:
        kernel = _residual_block_kernel_noproj
        in_specs = [x_spec, pl.BlockSpec((in_dim, out_dim), resident), w2_spec, vec_spec]
        args = (x, params["w1"], params["w2"], vecs)
        w_bytes = params["w1"].size * 2 + params["w2"].size * 2
        flops = 2 * B * (in_dim * out_dim + out_dim * out_dim)

    out_itemsize = jnp.dtype(out_dtype).itemsize
    bytes_accessed = (x.size * 4 + w_bytes + vecs.size * 4 + B * out_dim * out_itemsize)
    cost = pl.CostEstimate(flops=flops, transcendentals=2 * B, bytes_accessed=bytes_accessed)

    # ---- VMEM budget derived from the actual footprint (double-buffered streams + residents).
    stream_bytes = 2 * (TB * in_dim * 4 + TB * out_dim * out_itemsize)
    resident_bytes = 2 * (w_bytes + vecs.size * 4)
    need = stream_bytes + resident_bytes + (4 << 20)                 # slack for compiler temps
    vmem_limit = max(32 << 20, min(need, 100 << 20))                 # v7x phys is 64 MiB; see TODO above

    cparams = pltpu.CompilerParams(
        dimension_semantics=("parallel",),    # batch tiles shard over v7x's 2 TensorCores
        vmem_limit_bytes=int(vmem_limit),
    )

    return pl.pallas_call(
        kernel,
        out_shape=jax.ShapeDtypeStruct((B, out_dim), out_dtype),
        grid=grid,
        in_specs=in_specs,
        out_specs=o_spec,
        compiler_params=cparams,
        cost_estimate=cost,
    )(*args)


def init_params(key, in_dim, out_dim):
    """Deterministic synthetic init. Linear weights stored (in, out) in bf16 (MXU operands);
    biases / LN affine in f32. No identity projection materialized when dims match."""
    ks = jax.random.split(key, 6)
    p = {
        "w1": (jax.random.normal(ks[0], (in_dim, out_dim), jnp.float32) * 0.1).astype(jnp.bfloat16),
        "b1": jax.random.normal(ks[1], (1, out_dim), jnp.float32) * 0.01,
        "w2": (jax.random.normal(ks[2], (out_dim, out_dim), jnp.float32) * 0.1).astype(jnp.bfloat16),
        "b2": jax.random.normal(ks[3], (1, out_dim), jnp.float32) * 0.01,
        "g1": jnp.ones((1, out_dim), jnp.float32),
        "be1": jnp.zeros((1, out_dim), jnp.float32),
        "g2": jnp.ones((1, out_dim), jnp.float32),
        "be2": jnp.zeros((1, out_dim), jnp.float32),
    }
    if in_dim != out_dim:
        p["wp"] = (jax.random.normal(ks[4], (in_dim, out_dim), jnp.float32) * 0.1).astype(jnp.bfloat16)
        p["bp"] = jax.random.normal(ks[5], (1, out_dim), jnp.float32) * 0.01
    return p


def residual_block_ref_mixed(x, p, out_dtype=jnp.bfloat16):
    """Pure-JAX reference mirroring the kernel's mixed precision (bf16 MXU operands,
    f32 accumulate / LN, f32 identity skip). Tight-tolerance check of the kernel plumbing."""
    def ln(h, g, b, eps=_LN_EPS):
        mu = jnp.mean(h, axis=-1, keepdims=True)
        var = jnp.maximum(jnp.mean(h * h, axis=-1, keepdims=True) - mu * mu, 0.0)
        return (h - mu) * jax.lax.rsqrt(var + eps) * g + b

    xb = x.astype(jnp.bfloat16)
    if "wp" in p:
        residual = jnp.dot(xb, p["wp"], preferred_element_type=jnp.float32) + p["bp"]
    else:
        residual = x
    h = jnp.dot(xb, p["w1"], preferred_element_type=jnp.float32) + p["b1"]
    h = jax.nn.relu(ln(h, p["g1"], p["be1"]))
    h = jnp.dot(h.astype(jnp.bfloat16), p["w2"], preferred_element_type=jnp.float32) + p["b2"]
    h = ln(h, p["g2"], p["be2"]) + residual
    return jax.nn.relu(h).astype(out_dtype)


def residual_block_ref_f32(x, p):
    """Full-f32 reference matching the PyTorch eval-mode forward (weights up-cast to f32).
    Used with a loose, bf16-aware tolerance to bound drift vs the true model."""
    def ln(h, g, b, eps=_LN_EPS):
        mu = jnp.mean(h, axis=-1, keepdims=True)
        var = jnp.mean((h - mu) ** 2, axis=-1, keepdims=True)
        return (h - mu) * jax.lax.rsqrt(var + eps) * g + b

    w1 = p["w1"].astype(jnp.float32)
    w2 = p["w2"].astype(jnp.float32)
    if "wp" in p:
        residual = x @ p["wp"].astype(jnp.float32) + p["bp"]
    else:
        residual = x
    h = x @ w1 + p["b1"]
    h = jax.nn.relu(ln(h, p["g1"], p["be1"]))
    h = h @ w2 + p["b2"]
    h = ln(h, p["g2"], p["be2"]) + residual
    return jax.nn.relu(h)


if __name__ == "__main__":
    key = jax.random.PRNGKey(0)
    kx1, kx2, kp1, kp2 = jax.random.split(key, 4)

    # Case 1: in_dim != out_dim -> fused [wp | w1] projection path, bf16 writeback.
    B1, in_dim, out_dim = 256, 128, 256
    x1 = jax.random.normal(kx1, (B1, in_dim), jnp.float32)
    p1 = init_params(kp1, in_dim, out_dim)
    y1 = jax.block_until_ready(residual_block(x1, p1, batch_tile=512, out_dtype=jnp.bfloat16))
    assert y1.shape == (B1, out_dim) and y1.dtype == jnp.bfloat16
    y1f = y1.astype(jnp.float32)
    r1m = residual_block_ref_mixed(x1, p1, out_dtype=jnp.bfloat16).astype(jnp.float32)
    assert jnp.allclose(y1f, r1m, atol=3e-2, rtol=3e-2), float(jnp.max(jnp.abs(y1f - r1m)))
    r1f = residual_block_ref_f32(x1, p1)
    assert jnp.allclose(y1f, r1f, atol=1e-1, rtol=1e-1), float(jnp.max(jnp.abs(y1f - r1f)))

    # Case 2: in_dim == out_dim -> identity skip (no projection matmul compiled), f32 output.
    B2, D = 128, 128
    x2 = jax.random.normal(kx2, (B2, D), jnp.float32)
    p2 = init_params(kp2, D, D)
    y2 = jax.block_until_ready(residual_block(x2, p2, batch_tile=512, out_dtype=jnp.float32))
    assert y2.shape == (B2, D) and y2.dtype == jnp.float32
    r2m = residual_block_ref_mixed(x2, p2, out_dtype=jnp.float32)
    assert jnp.allclose(y2, r2m, atol=2e-3, rtol=2e-3), float(jnp.max(jnp.abs(y2 - r2m)))
    r2f = residual_block_ref_f32(x2, p2)
    assert jnp.allclose(y2, r2f, atol=1e-1, rtol=1e-1), float(jnp.max(jnp.abs(y2 - r2f)))

    print("KERNEL_OK")
</pallas_src>

<mosaic_0001>
module attributes {stable_mosaic.version = 11 : i64} {
  func.func @_residual_block_kernel_proj(%arg0: i32, %arg1: memref<128x128xf32, #tpu.memory_space<vmem>>, %arg2: memref<128x512xbf16, #tpu.memory_space<vmem>>, %arg3: memref<256x256xbf16, #tpu.memory_space<vmem>>, %arg4: memref<8x256xf32, #tpu.memory_space<vmem>>, %arg5: memref<128x256xbf16, #tpu.memory_space<vmem>>) attributes {dimension_semantics = [#tpu.dimension_semantics<parallel>], iteration_bounds = array<i64: 2>, scalar_prefetch = 0 : i64, scratch_operands = 0 : i64, tpu.core_type = #tpu.core_type<tc>, window_params = [{transform_indices = @transform_0, window_bounds = array<i64: 128, 128>}, {pipeline_mode = #tpu.pipeline_mode<synchronous>, transform_indices = @transform_1, window_bounds = array<i64: 128, 512>}, {pipeline_mode = #tpu.pipeline_mode<synchronous>, transform_indices = @transform_2, window_bounds = array<i64: 256, 256>}, {pipeline_mode = #tpu.pipeline_mode<synchronous>, transform_indices = @transform_3, window_bounds = array<i64: 8, 256>}, {transform_indices = @transform_4, window_bounds = array<i64: 128, 256>}]} {
    %c0 = arith.constant 0 : index
    %c0_0 = arith.constant 0 : index
    %0 = vector.load %arg4[%c0, %c0_0] : memref<8x256xf32, #tpu.memory_space<vmem>>, vector<8x256xf32>
    %1 = vector.extract_strided_slice %0 {offsets = [0, 0], sizes = [1, 256], strides = [1, 1]} : vector<8x256xf32> to vector<1x256xf32>
    %2 = vector.extract_strided_slice %0 {offsets = [1, 0], sizes = [1, 256], strides = [1, 1]} : vector<8x256xf32> to vector<1x256xf32>
    %3 = vector.extract_strided_slice %0 {offsets = [2, 0], sizes = [1, 256], strides = [1, 1]} : vector<8x256xf32> to vector<1x256xf32>
    %4 = vector.extract_strided_slice %0 {offsets = [3, 0], sizes = [1, 256], strides = [1, 1]} : vector<8x256xf32> to vector<1x256xf32>
    %5 = vector.extract_strided_slice %0 {offsets = [4, 0], sizes = [1, 256], strides = [1, 1]} : vector<8x256xf32> to vector<1x256xf32>
    %6 = vector.extract_strided_slice %0 {offsets = [5, 0], sizes = [1, 256], strides = [1, 1]} : vector<8x256xf32> to vector<1x256xf32>
    %7 = vector.extract_strided_slice %0 {offsets = [6, 0], sizes = [1, 256], strides = [1, 1]} : vector<8x256xf32> to vector<1x256xf32>
    %c0_1 = arith.constant 0 : index
    %c0_2 = arith.constant 0 : index
    %8 = vector.load %arg1[%c0_1, %c0_2] : memref<128x128xf32, #tpu.memory_space<vmem>>, vector<128x128xf32>
    %9 = arith.truncf %8 : vector<128x128xf32> to vector<128x128xbf16>
    %c0_3 = arith.constant 0 : index
    %c0_4 = arith.constant 0 : index
    %10 = vector.load %arg2[%c0_3, %c0_4] : memref<128x512xbf16, #tpu.memory_space<vmem>>, vector<128x512xbf16>
    %cst = arith.constant dense<0.000000e+00> : vector<128x512xf32>
    %11 = tpu.matmul %9, %10, %cst {dimension_numbers = #tpu.dot_dimension_numbers<[1], [0], [0], [1], [0, 0, 1, 1], [], []>} : vector<128x128xbf16>, vector<128x512xbf16>, vector<128x512xf32> -> vector<128x512xf32>
    %12 = vector.extract_strided_slice %11 {offsets = [0, 0], sizes = [128, 256], strides = [1, 1]} : vector<128x512xf32> to vector<128x256xf32>
    %13 = vector.broadcast %7 : vector<1x256xf32> to vector<128x256xf32>
    %14 = arith.addf %12, %13 : vector<128x256xf32>
    %15 = vector.extract_strided_slice %11 {offsets = [0, 256], sizes = [128, 256], strides = [1, 1]} : vector<128x512xf32> to vector<128x256xf32>
    %16 = vector.broadcast %1 : vector<1x256xf32> to vector<128x256xf32>
    %17 = arith.addf %15, %16 : vector<128x256xf32>
    %cst_5 = arith.constant dense<0.000000e+00> : vector<128xf32>
    %18 = vector.multi_reduction <add>, %17, %cst_5 [1] : vector<128x256xf32> to vector<128xf32>
    %19 = vector.shape_cast %18 : vector<128xf32> to vector<128x1xf32>
    %cst_6 = arith.constant 2.560000e+02 : f32
    %20 = vector.broadcast %cst_6 : f32 to vector<128x1xf32>
    %21 = arith.divf %19, %20 : vector<128x1xf32>
    %22 = arith.mulf %17, %17 : vector<128x256xf32>
    %cst_7 = arith.constant dense<0.000000e+00> : vector<128xf32>
    %23 = vector.multi_reduction <add>, %22, %cst_7 [1] : vector<128x256xf32> to vector<128xf32>
    %24 = vector.shape_cast %23 : vector<128xf32> to vector<128x1xf32>
    %cst_8 = arith.constant 2.560000e+02 : f32
    %25 = vector.broadcast %cst_8 : f32 to vector<128x1xf32>
    %26 = arith.divf %24, %25 : vector<128x1xf32>
    %27 = arith.mulf %21, %21 : vector<128x1xf32>
    %28 = arith.subf %26, %27 : vector<128x1xf32>
    %cst_9 = arith.constant 0.000000e+00 : f32
    %29 = vector.broadcast %cst_9 : f32 to vector<128x1xf32>
    %30 = arith.maximumf %28, %29 : vector<128x1xf32>
    %31 = vector.broadcast %21 : vector<128x1xf32> to vector<128x256xf32>
    %32 = arith.subf %17, %31 : vector<128x256xf32>
    %cst_10 = arith.constant 9.99999974E-6 : f32
    %33 = vector.broadcast %cst_10 : f32 to vector<128x1xf32>
    %34 = arith.addf %30, %33 : vector<128x1xf32>
    %35 = math.rsqrt %34 : vector<128x1xf32>
    %36 = vector.broadcast %35 : vector<128x1xf32> to vector<128x256xf32>
    %37 = arith.mulf %32, %36 : vector<128x256xf32>
    %38 = vector.broadcast %2 : vector<1x256xf32> to vector<128x256xf32>
    %39 = arith.mulf %37, %38 : vector<128x256xf32>
    %40 = vector.broadcast %3 : vector<1x256xf32> to vector<128x256xf32>
    %41 = arith.addf %39, %40 : vector<128x256xf32>
    %cst_11 = arith.constant 0.000000e+00 : f32
    %42 = vector.broadcast %cst_11 : f32 to vector<128x256xf32>
    %43 = arith.maximumf %41, %42 : vector<128x256xf32>
    %44 = arith.truncf %43 : vector<128x256xf32> to vector<128x256xbf16>
    %c0_12 = arith.constant 0 : index
    %c0_13 = arith.constant 0 : index
    %45 = vector.load %arg3[%c0_12, %c0_13] : memref<256x256xbf16, #tpu.memory_space<vmem>>, vector<256x256xbf16>
    %cst_14 = arith.constant dense<0.000000e+00> : vector<128x256xf32>
    %46 = tpu.matmul %44, %45, %cst_14 {dimension_numbers = #tpu.dot_dimension_numbers<[1], [0], [0], [1], [0, 0, 1, 1], [], []>} : vector<128x256xbf16>, vector<256x256xbf16>, vector<128x256xf32> -> vector<128x256xf32>
    %47 = vector.broadcast %4 : vector<1x256xf32> to vector<128x256xf32>
    %48 = arith.addf %46, %47 : vector<128x256xf32>
    %cst_15 = arith.constant dense<0.000000e+00> : vector<128xf32>
    %49 = vector.multi_reduction <add>, %48, %cst_15 [1] : vector<128x256xf32> to vector<128xf32>
    %50 = vector.shape_cast %49 : vector<128xf32> to vector<128x1xf32>
    %cst_16 = arith.constant 2.560000e+02 : f32
    %51 = vector.broadcast %cst_16 : f32 to vector<128x1xf32>
    %52 = arith.divf %50, %51 : vector<128x1xf32>
    %53 = arith.mulf %48, %48 : vector<128x256xf32>
    %cst_17 = arith.constant dense<0.000000e+00> : vector<128xf32>
    %54 = vector.multi_reduction <add>, %53, %cst_17 [1] : vector<128x256xf32> to vector<128xf32>
    %55 = vector.shape_cast %54 : vector<128xf32> to vector<128x1xf32>
    %cst_18 = arith.constant 2.560000e+02 : f32
    %56 = vector.broadcast %cst_18 : f32 to vector<128x1xf32>
    %57 = arith.divf %55, %56 : vector<128x1xf32>
    %58 = arith.mulf %52, %52 : vector<128x1xf32>
    %59 = arith.subf %57, %58 : vector<128x1xf32>
    %cst_19 = arith.constant 0.000000e+00 : f32
    %60 = vector.broadcast %cst_19 : f32 to vector<128x1xf32>
    %61 = arith.maximumf %59, %60 : vector<128x1xf32>
    %62 = vector.broadcast %52 : vector<128x1xf32> to vector<128x256xf32>
    %63 = arith.subf %48, %62 : vector<128x256xf32>
    %cst_20 = arith.constant 9.99999974E-6 : f32
    %64 = vector.broadcast %cst_20 : f32 to vector<128x1xf32>
    %65 = arith.addf %61, %64 : vector<128x1xf32>
    %66 = math.rsqrt %65 : vector<128x1xf32>
    %67 = vector.broadcast %66 : vector<128x1xf32> to vector<128x256xf32>
    %68 = arith.mulf %63, %67 : vector<128x256xf32>
    %69 = vector.broadcast %5 : vector<1x256xf32> to vector<128x256xf32>
    %70 = arith.mulf %68, %69 : vector<128x256xf32>
    %71 = vector.broadcast %6 : vector<1x256xf32> to vector<128x256xf32>
    %72 = arith.addf %70, %71 : vector<128x256xf32>
    %73 = arith.addf %72, %14 : vector<128x256xf32>
    %cst_21 = arith.constant 0.000000e+00 : f32
    %74 = vector.broadcast %cst_21 : f32 to vector<128x256xf32>
    %75 = arith.maximumf %73, %74 : vector<128x256xf32>
    %76 = arith.truncf %75 : vector<128x256xf32> to vector<128x256xbf16>
    %c0_22 = arith.constant 0 : index
    %c0_23 = arith.constant 0 : index
    %77 = vector.load %arg5[%c0_22, %c0_23] : memref<128x256xbf16, #tpu.memory_space<vmem>>, vector<128x256xbf16>
    tpu.vector_store %arg5[%c0_22, %c0_23], %76 {strides = array<i32>} : memref<128x256xbf16, #tpu.memory_space<vmem>>, vector<128x256xbf16>,
    return
  }
  func.func @transform_0(%arg0: i32) -> (i32, i32) {
    %c0_i32 = arith.constant 0 : i32
    %c0_i32_0 = arith.constant 0 : i32
    return %arg0, %c0_i32 : i32, i32
  }
  func.func @transform_1(%arg0: i32) -> (i32, i32) {
    %c0_i32 = arith.constant 0 : i32
    %c0_i32_0 = arith.constant 0 : i32
    %c0_i32_1 = arith.constant 0 : i32
    return %c0_i32, %c0_i32_0 : i32, i32
  }
  func.func @transform_2(%arg0: i32) -> (i32, i32) {
    %c0_i32 = arith.constant 0 : i32
    %c0_i32_0 = arith.constant 0 : i32
    %c0_i32_1 = arith.constant 0 : i32
    return %c0_i32, %c0_i32_0 : i32, i32
  }
  func.func @transform_3(%arg0: i32) -> (i32, i32) {
    %c0_i32 = arith.constant 0 : i32
    %c0_i32_0 = arith.constant 0 : i32
    %c0_i32_1 = arith.constant 0 : i32
    return %c0_i32, %c0_i32_0 : i32, i32
  }
  func.func @transform_4(%arg0: i32) -> (i32, i32) {
    %c0_i32 = arith.constant 0 : i32
    %c0_i32_0 = arith.constant 0 : i32
    return %arg0, %c0_i32 : i32, i32
  }
}

</mosaic_0001>

<llo_original>
// kernel: tpu_custom_call.1
$region0: #{tpu_custom_call.1}
  #allocation0 [shape = 'u32[]', space=smem, size = 0x4, offset = 0x4, fixed_abs, tag = 'smem constant byte address 0x4 - core index']
  #allocation1 [shape = 'u32[144,128]{1,0:T(1,128)}', space=vmem, size = 0x12000, scoped, tag = 'internal scratch']
  %s0 = inlined_call_operand.hbm [shape: f32[256,128], index: 0, kind: input, shape index: {}]
  %s1 = inlined_call_operand.hbm [shape: bf16[128,512], index: 1, kind: input, shape index: {}]
  %s2 = inlined_call_operand.hbm [shape: bf16[256,256], index: 2, kind: input, shape index: {}]
  %s3 = inlined_call_operand.hbm [shape: f32[8,256], index: 3, kind: input, shape index: {}]
  %s4 = inlined_call_operand.hbm [shape: bf16[256,256], index: 4, kind: output, shape index: {}]
  %s5 = sld [smem:[#allocation0]]
  $region65: #{tpu_custom_call.1} parent=0
    _
  %s7 = ssub.s32 1, %s5
  %s8 = scalar_select 0, %s7, %s5
  $region1: #{tpu_custom_call.1} parent=0
    #allocation2 [shape = 'u8[131072]{0}', space=vmem, size = 0x20000, scoped, tag = 'input window, operand 0']
    #allocation3 [shape = 's32[2]{0}', space=sflag, size = 0x8, scoped, tag = 'scoped memory for tpu_custom_call.1']
    #allocation4 [shape = 's32[2]{0}', space=sflag, size = 0x8, scoped, tag = 'scoped memory for tpu_custom_call.1']
    #allocation5 [shape = 'u8[131072]{0}', space=vmem, size = 0x20000, scoped, tag = 'input window, operand 1, single buffered']
    #allocation6 [shape = 's32[1]{0}', space=sflag, size = 0x4, scoped, tag = 'scoped memory for tpu_custom_call.1']
    #allocation7 [shape = 'u8[131072]{0}', space=vmem, size = 0x20000, scoped, tag = 'input window, operand 2, single buffered']
    #allocation8 [shape = 'u8[8192]{0}', space=vmem, size = 0x2000, scoped, tag = 'input window, operand 3, single buffered']
    #allocation9 [shape = 's32[1]{0}', space=sflag, size = 0x4, scoped, tag = 'scoped memory for tpu_custom_call.1']
    #allocation10 [shape = 'u8[131072]{0}', space=vmem, size = 0x20000, scoped, tag = 'output window, operand 0']
    %9 = vsyncpa [#allocation3], 0
    %s10 = scalar_lea.sflag [#allocation3], 1
    %11 = vsyncpa %s10, 0
    %12 = vsyncpa [#allocation6], 0
    %13 = vsyncpa [#allocation9], 0
    %14 = vsyncpa [#allocation4], 0
    %s15 = scalar_lea.sflag [#allocation4], 1
    %16 = vsyncpa %s15, 0
    loop: start=0, step=1, limit=4
    $region2: #{tpu_custom_call.1} parent=1 // loop_pre_header
      _
    $region3: #{tpu_custom_call.1} parent=1 // loop_header
      %s18 = sphi 0, %s22
      %p19 = scmp.ge.s32.totalorder %s18, 4
      %s28 = sphi 0, %s30
      %s31 = sphi 0, %s28
      %s32 = sphi 0, %s31
      %s48 = sphi 0, %s32
      %s52 = sphi 0, %s52
      %s54 = sphi 0, %s52
      %s55 = sphi 0, %s54
      %s69 = sphi 0, %s55
      %s73 = sphi 0, %s73
      %s75 = sphi 0, %s73
      %s76 = sphi 0, %s75
      %s90 = sphi 0, %s76
      %s94 = sphi 0, %s94
      %s96 = sphi 0, %s94
      %s97 = sphi 0, %s96
      %s111 = sphi 0, %s97
      %s117 = sphi 0, %s119
      %s120 = sphi 0, %s117
      %s121 = sphi 0, %s120
      %s137 = sphi 0, %s121
    $region4: #{tpu_custom_call.1} parent=1 // loop_header_branch
      %21 = sbr.rel (%p19) target = $region8
    $region5: #{tpu_custom_call.1} parent=1 // loop_body
      %s23 = ssub.s32 %s18, 1
      %s24 = ssub.s32 %s18, 2
      %s25 = sadd.s32 %s18, 1
      %s26 = ssub.s32 %s18, %s25
      %p27 = scmp.eq.s32.totalorder %s26, 0
      %s29 = sadd.s32 %s28, 1
      %s30 = scalar_select %p27, %s28, %s29
      %p33 = pneg %p27
      %p34 = scmp.eq.s32.totalorder %s18, 1
      %p35 = por %p33, %p34
      %p36 = scmp.ne.s32.totalorder %s28, %s31
      %p37 = scmp.eq.s32.totalorder %s18, 0
      %p38 = por %p36, %p37
      %p39 = scmp.ne.s32.totalorder %s28, %s31
      %p40 = scmp.eq.s32.totalorder %s23, 1
      %p41 = por %p39, %p40
      %p42 = scmp.ne.s32.totalorder %s31, %s32
      %p43 = scmp.eq.s32.totalorder %s23, 0
      %p44 = por %p42, %p43
      %p45 = scmp.ne.s32.totalorder %s31, %s32
      %p46 = scmp.eq.s32.totalorder %s24, 1
      %p47 = por %p45, %p46
      %p49 = scmp.ne.s32.totalorder %s32, %s48
      %p50 = scmp.eq.s32.totalorder %s24, 0
      %p51 = por %p49, %p50
      %s53 = sadd.s32 %s52, 1
      %p56 = scmp.eq.s32.totalorder %s18, 1
      %p57 = scmp.ne.s32.totalorder %s52, %s54
      %p58 = scmp.eq.s32.totalorder %s18, 0
      %p59 = por %p57, %p58
      %p60 = scmp.ne.s32.totalorder %s52, %s54
      %p61 = scmp.eq.s32.totalorder %s23, 1
      %p62 = por %p60, %p61
      %p63 = scmp.ne.s32.totalorder %s54, %s55
      %p64 = scmp.eq.s32.totalorder %s23, 0
      %p65 = por %p63, %p64
      %p66 = scmp.ne.s32.totalorder %s54, %s55
      %p67 = scmp.eq.s32.totalorder %s24, 1
      %p68 = por %p66, %p67
      %p70 = scmp.ne.s32.totalorder %s55, %s69
      %p71 = scmp.eq.s32.totalorder %s24, 0
      %p72 = por %p70, %p71
      %s74 = sadd.s32 %s73, 1
      %p77 = scmp.eq.s32.totalorder %s18, 1
      %p78 = scmp.ne.s32.totalorder %s73, %s75
      %p79 = scmp.eq.s32.totalorder %s18, 0
      %p80 = por %p78, %p79
      %p81 = scmp.ne.s32.totalorder %s73, %s75
      %p82 = scmp.eq.s32.totalorder %s23, 1
      %p83 = por %p81, %p82
      %p84 = scmp.ne.s32.totalorder %s75, %s76
      %p85 = scmp.eq.s32.totalorder %s23, 0
      %p86 = por %p84, %p85
      %p87 = scmp.ne.s32.totalorder %s75, %s76
      %p88 = scmp.eq.s32.totalorder %s24, 1
      %p89 = por %p87, %p88
      %p91 = scmp.ne.s32.totalorder %s76, %s90
      %p92 = scmp.eq.s32.totalorder %s24, 0
      %p93 = por %p91, %p92
      %s95 = sadd.s32 %s94, 1
      %p98 = scmp.eq.s32.totalorder %s18, 1
      %p99 = scmp.ne.s32.totalorder %s94, %s96
      %p100 = scmp.eq.s32.totalorder %s18, 0
      %p101 = por %p99, %p100
      %p102 = scmp.ne.s32.totalorder %s94, %s96
      %p103 = scmp.eq.s32.totalorder %s23, 1
      %p104 = por %p102, %p103
      %p105 = scmp.ne.s32.totalorder %s96, %s97
      %p106 = scmp.eq.s32.totalorder %s23, 0
      %p107 = por %p105, %p106
      %p108 = scmp.ne.s32.totalorder %s96, %s97
      %p109 = scmp.eq.s32.totalorder %s24, 1
      %p110 = por %p108, %p109
      %p112 = scmp.ne.s32.totalorder %s97, %s111
      %p113 = scmp.eq.s32.totalorder %s24, 0
      %p114 = por %p112, %p113
      %s115 = ssub.s32 %s18, %s25
      %p116 = scmp.eq.s32.totalorder %s115, 0
      %s118 = sadd.s32 %s117, 1
      %s119 = scalar_select %p116, %s117, %s118
      %p122 = pneg %p116
      %p123 = scmp.eq.s32.totalorder %s18, 1
      %p124 = por %p122, %p123
      %p125 = scmp.ne.s32.totalorder %s117, %s120
      %p126 = scmp.eq.s32.totalorder %s18, 0
      %p127 = por %p125, %p126
      %p128 = scmp.ne.s32.totalorder %s117, %s120
      %p129 = scmp.eq.s32.totalorder %s23, 1
      %p130 = por %p128, %p129
      %p131 = scmp.ne.s32.totalorder %s120, %s121
      %p132 = scmp.eq.s32.totalorder %s23, 0
      %p133 = por %p131, %p132
      %p134 = scmp.ne.s32.totalorder %s120, %s121
      %p135 = scmp.eq.s32.totalorder %s24, 1
      %p136 = por %p134, %p135
      %p138 = scmp.ne.s32.totalorder %s121, %s137
      %p139 = scmp.eq.s32.totalorder %s24, 0
      %p140 = por %p138, %p139
      %p141 = scmp.le.s32.totalorder 1, %s18
      %p142 = scmp.lt.s32.totalorder %s18, 3
      %p143 = pnand %p141, %p142
      %p144 = pneg %p143
      // Predicated region
      $region9: #{tpu_custom_call.1} parent=5 // pred_check
        _
      $region10: #{tpu_custom_call.1} parent=5 // pred_check_branch
        %146 = sbr.rel (%p143) target = $region12
      $region11: #{tpu_custom_call.1} parent=5 // pred_region
        %s147 = ssub.s32 %s18, 1
        // Predicated region
        $region13: #{tpu_custom_call.1} parent=11 // pred_check
          %p148 = pneg %p65
        $region14: #{tpu_custom_call.1} parent=11 // pred_check_branch
          %150 = sbr.rel (%p148) target = $region16
        $region15: #{tpu_custom_call.1} parent=11 // pred_region
          %s152 = ssub.s32 4096, 4096
          %153 = vsyncadd [#allocation6], %s152
          %s154 = sshll.u32 [#allocation5], 4
          %s155 = int_to_ptr.vmem [resolvable:$true] %s154
          %160 = dma.hbm_to_vmem [thread:$0]  %s1, 4096, %s155, [#allocation6], 256, 256, 16
        $region16: #{tpu_custom_call.1} parent=11 // pred_fallthru
          _
        // Predicated region
        $region17: #{tpu_custom_call.1} parent=11 // pred_check
          %p161 = pneg %p86
        $region18: #{tpu_custom_call.1} parent=11 // pred_check_branch
          %163 = sbr.rel (%p161) target = $region20
        $region19: #{tpu_custom_call.1} parent=11 // pred_region
          %s165 = ssub.s32 4096, 4096
          %166 = vsyncadd [#allocation6], %s165
          %s167 = sshll.u32 [#allocation7], 4
          %s168 = int_to_ptr.vmem [resolvable:$true] %s167
          %173 = dma.hbm_to_vmem [thread:$0]  %s2, 4096, %s168, [#allocation6], 128, 128, 8
        $region20: #{tpu_custom_call.1} parent=11 // pred_fallthru
          _
        // Predicated region
        $region21: #{tpu_custom_call.1} parent=11 // pred_check
          %p174 = pneg %p107
        $region22: #{tpu_custom_call.1} parent=11 // pred_check_branch
          %176 = sbr.rel (%p174) target = $region24
        $region23: #{tpu_custom_call.1} parent=11 // pred_region
          %s178 = ssub.s32 256, 256
          %179 = vsyncadd [#allocation9], %s178
          %s181 = sshll.u32 [#allocation8], 4
          %s182 = int_to_ptr.vmem [resolvable:$true] %s181
          %184 = dma.hbm_to_vmem [thread:$0]  %s3, 256, %s182, [#allocation9]
        $region24: #{tpu_custom_call.1} parent=11 // pred_fallthru
          _
      $region12: #{tpu_custom_call.1} parent=5 // pred_fallthru
        _
      %p185 = scmp.lt.s32.totalorder %s18, 2
      // Predicated region
      $region25: #{tpu_custom_call.1} parent=5 // pred_check
        %p186 = pneg %p185
      $region26: #{tpu_custom_call.1} parent=5 // pred_check_branch
        %188 = sbr.rel (%p186) target = $region28
      $region27: #{tpu_custom_call.1} parent=5 // pred_region
        // Predicated region
        $region29: #{tpu_custom_call.1} parent=27 // pred_check
          %p189 = pneg %p38
        $region30: #{tpu_custom_call.1} parent=27 // pred_check_branch
          %191 = sbr.rel (%p189) target = $region32
        $region31: #{tpu_custom_call.1} parent=27 // pred_region
          %s192 = sand.u32 %s28, 1
          %s193 = scalar_lea.sflag [#allocation3], %s192
          %s194 = sand.u32 %s28, 1
          %s195 = smul.addr %s194, 128
          %s196 = scalar_lea.vmem [#allocation2], %s195
          %s197 = smul.u32 16, %s18
          %s199 = ssub.s32 2048, 2048
          %200 = vsyncadd %s193, %s199
          %s201 = smul.addr %s197, 128
          %s202 = scalar_lea.hbm %s0, %s201
          %s203 = sshll.u32 %s196, 4
          %s204 = int_to_ptr.vmem [resolvable:$true] %s203
          %209 = dma.hbm_to_vmem [thread:$0]  %s202, 2048, %s204, %s193, 128, 128, 8
        $region32: #{tpu_custom_call.1} parent=27 // pred_fallthru
          _
      $region28: #{tpu_custom_call.1} parent=5 // pred_fallthru
        _
      %p210 = scmp.le.s32.totalorder 1, %s18
      %p211 = scmp.lt.s32.totalorder %s18, 3
      %p212 = pnand %p210, %p211
      %p213 = pneg %p212
      // Predicated region
      $region33: #{tpu_custom_call.1} parent=5 // pred_check
        _
      $region34: #{tpu_custom_call.1} parent=5 // pred_check_branch
        %215 = sbr.rel (%p212) target = $region36
      $region35: #{tpu_custom_call.1} parent=5 // pred_region
        %s216 = ssub.s32 %s18, 1
        %s217 = sand.u32 %s31, 1
        %s218 = scalar_lea.sflag [#allocation3], %s217
        %s219 = sand.u32 %s31, 1
        %s220 = smul.addr %s219, 128
        %s221 = scalar_lea.vmem [#allocation2], %s220
        // Predicated region
        $region37: #{tpu_custom_call.1} parent=35 // pred_check
          %p222 = pneg %p44
        $region38: #{tpu_custom_call.1} parent=35 // pred_check_branch
          %224 = sbr.rel (%p222) target = $region40
        $region39: #{tpu_custom_call.1} parent=35 // pred_region
          %225 = dma.done %s218, 2048
        $region40: #{tpu_custom_call.1} parent=35 // pred_fallthru
          _
        // Predicated region
        $region41: #{tpu_custom_call.1} parent=35 // pred_check
          %p226 = pneg %p65
        $region42: #{tpu_custom_call.1} parent=35 // pred_check_branch
          %228 = sbr.rel (%p226) target = $region44
        $region43: #{tpu_custom_call.1} parent=35 // pred_region
          %229 = dma.done [#allocation6], 4096
        $region44: #{tpu_custom_call.1} parent=35 // pred_fallthru
          _
        // Predicated region
        $region45: #{tpu_custom_call.1} parent=35 // pred_check
          %p230 = pneg %p86
        $region46: #{tpu_custom_call.1} parent=35 // pred_check_branch
          %232 = sbr.rel (%p230) target = $region48
        $region47: #{tpu_custom_call.1} parent=35 // pred_region
          %233 = dma.done [#allocation6], 4096
        $region48: #{tpu_custom_call.1} parent=35 // pred_fallthru
          _
        // Predicated region
        $region49: #{tpu_custom_call.1} parent=35 // pred_check
          %p234 = pneg %p107
        $region50: #{tpu_custom_call.1} parent=35 // pred_check_branch
          %236 = sbr.rel (%p234) target = $region52
        $region51: #{tpu_custom_call.1} parent=35 // pred_region
          %237 = dma.done [#allocation9], 256
        $region52: #{tpu_custom_call.1} parent=35 // pred_fallthru
          _
        %s238 = sand.u32 %s31, 1
        %s239 = scalar_lea.sflag [#allocation3], %s238
        %s240 = sand.u32 %s31, 1
        %s241 = smul.addr %s240, 128
        %s242 = scalar_lea.vmem [#allocation2], %s241
        %p243 = pneg %p44
        %p244 = pneg %p41
        %p245 = pneg %p65
        %p246 = pneg %p62
        %p247 = pneg %p86
        %p248 = pneg %p83
        %p249 = pneg %p107
        %p250 = pneg %p104
        %p251 = pneg %p133
        %p252 = pneg %p130
        %s253 = sand.u32 %s120, 1
        %s254 = scalar_lea.sflag [#allocation4], %s253
        %s255 = sand.u32 %s120, 1
        %s256 = smul.addr %s255, 128
        %s257 = scalar_lea.vmem [#allocation10], %s256
        %s258 = smul.u32 16, %s23
        %s259 = smul.u32 16, %s23
        %v261 = vld [vmem:[#allocation8] sm:$0xff]
        %v262 = vld [vmem:[#allocation8 + $0x8] sm:$0xff]
        %v263 = vld [vmem:[%s221] sm:$0xff]
        %v264 = vld [vmem:[%s221 + $0x8] sm:$0xff]
        %v265 = vld [vmem:[%s221 + $0x10] sm:$0xff]
        %v266 = vld [vmem:[%s221 + $0x18] sm:$0xff]
        %v267 = vld [vmem:[%s221 + $0x20] sm:$0xff]
        %v268 = vld [vmem:[%s221 + $0x28] sm:$0xff]
        %v269 = vld [vmem:[%s221 + $0x30] sm:$0xff]
        %v270 = vld [vmem:[%s221 + $0x38] sm:$0xff]
        %v271 = vld [vmem:[%s221 + $0x40] sm:$0xff]
        %v272 = vld [vmem:[%s221 + $0x48] sm:$0xff]
        %v273 = vld [vmem:[%s221 + $0x50] sm:$0xff]
        %v274 = vld [vmem:[%s221 + $0x58] sm:$0xff]
        %v275 = vld [vmem:[%s221 + $0x60] sm:$0xff]
        %v276 = vld [vmem:[%s221 + $0x68] sm:$0xff]
        %v277 = vld [vmem:[%s221 + $0x70] sm:$0xff]
        %v278 = vld [vmem:[%s221 + $0x78] sm:$0xff]
        %v279 = vpack.c.bf16 %v264, %v263
        %v280 = vpack.c.bf16 %v266, %v265
        %v281 = vpack.c.bf16 %v268, %v267
        %v282 = vpack.c.bf16 %v270, %v269
        %v283 = vpack.c.bf16 %v272, %v271
        %v284 = vpack.c.bf16 %v274, %v273
        %v285 = vpack.c.bf16 %v276, %v275
        %v286 = vpack.c.bf16 %v278, %v277
        %v287 = vld [vmem:[#allocation5] sm:$0xff]
        %v288 = vld [vmem:[#allocation5 + $0x8] sm:$0xff]
        %v289 = vld [vmem:[#allocation5 + $0x10] sm:$0xff]
        %v290 = vld [vmem:[#allocation5 + $0x18] sm:$0xff]
        %v291 = vld [vmem:[#allocation5 + $0x20] sm:$0xff]
        %v292 = vld [vmem:[#allocation5 + $0x28] sm:$0xff]
        %v293 = vld [vmem:[#allocation5 + $0x30] sm:$0xff]
        %v294 = vld [vmem:[#allocation5 + $0x38] sm:$0xff]
        %v295 = vld [vmem:[#allocation5 + $0x40] sm:$0xff]
        %v296 = vld [vmem:[#allocation5 + $0x48] sm:$0xff]
        %v297 = vld [vmem:[#allocation5 + $0x50] sm:$0xff]
        %v298 = vld [vmem:[#allocation5 + $0x58] sm:$0xff]
        %v299 = vld [vmem:[#allocation5 + $0x60] sm:$0xff]
        %v300 = vld [vmem:[#allocation5 + $0x68] sm:$0xff]
        %v301 = vld [vmem:[#allocation5 + $0x70] sm:$0xff]
        %v302 = vld [vmem:[#allocation5 + $0x78] sm:$0xff]
        %v303 = vld [vmem:[#allocation5 + $0x80] sm:$0xff]
        %v304 = vld [vmem:[#allocation5 + $0x88] sm:$0xff]
        %v305 = vld [vmem:[#allocation5 + $0x90] sm:$0xff]
        %v306 = vld [vmem:[#allocation5 + $0x98] sm:$0xff]
        %v307 = vld [vmem:[#allocation5 + $0xa0] sm:$0xff]
        %v308 = vld [vmem:[#allocation5 + $0xa8] sm:$0xff]
        %v309 = vld [vmem:[#allocation5 + $0xb0] sm:$0xff]
        %v310 = vld [vmem:[#allocation5 + $0xb8] sm:$0xff]
        %v311 = vld [vmem:[#allocation5 + $0xc0] sm:$0xff]
        %v312 = vld [vmem:[#allocation5 + $0xc8] sm:$0xff]
        %v313 = vld [vmem:[#allocation5 + $0xd0] sm:$0xff]
        %v314 = vld [vmem:[#allocation5 + $0xd8] sm:$0xff]
        %v315 = vld [vmem:[#allocation5 + $0xe0] sm:$0xff]
        %v316 = vld [vmem:[#allocation5 + $0xe8] sm:$0xff]
        %v317 = vld [vmem:[#allocation5 + $0xf0] sm:$0xff]
        %v318 = vld [vmem:[#allocation5 + $0xf8] sm:$0xff]
        %v351 = vunpack.c.l.b16 %v287
        %v352 = vunpack.c.h.b16 %v287
        %v353 = vunpack.c.l.b16 %v288
        %v354 = vunpack.c.h.b16 %v288
        %v355 = vunpack.c.l.b16 %v289
        %v356 = vunpack.c.h.b16 %v289
        %v357 = vunpack.c.l.b16 %v290
        %v358 = vunpack.c.h.b16 %v290
        %v359 = vunpack.c.l.b16 %v291
        %v360 = vunpack.c.h.b16 %v291
        %v361 = vunpack.c.l.b16 %v292
        %v362 = vunpack.c.h.b16 %v292
        %v363 = vunpack.c.l.b16 %v293
        %v364 = vunpack.c.h.b16 %v293
        %v365 = vunpack.c.l.b16 %v294
        %v366 = vunpack.c.h.b16 %v294
        %v367 = vunpack.c.l.b16 %v295
        %v368 = vunpack.c.h.b16 %v295
        %v369 = vunpack.c.l.b16 %v296
        %v370 = vunpack.c.h.b16 %v296
        %v371 = vunpack.c.l.b16 %v297
        %v372 = vunpack.c.h.b16 %v297
        %v373 = vunpack.c.l.b16 %v298
        %v374 = vunpack.c.h.b16 %v298
        %v375 = vunpack.c.l.b16 %v299
        %v376 = vunpack.c.h.b16 %v299
        %v377 = vunpack.c.l.b16 %v300
        %v378 = vunpack.c.h.b16 %v300
        %v379 = vunpack.c.l.b16 %v301
        %v380 = vunpack.c.h.b16 %v301
        %v381 = vunpack.c.l.b16 %v302
        %v382 = vunpack.c.h.b16 %v302
        %v383 = vunpack.c.l.b16 %v303
        %v384 = vunpack.c.h.b16 %v303
        %v385 = vunpack.c.l.b16 %v304
        %v386 = vunpack.c.h.b16 %v304
        %v387 = vunpack.c.l.b16 %v305
        %v388 = vunpack.c.h.b16 %v305
        %v389 = vunpack.c.l.b16 %v306
        %v390 = vunpack.c.h.b16 %v306
        %v391 = vunpack.c.l.b16 %v307
        %v392 = vunpack.c.h.b16 %v307
        %v393 = vunpack.c.l.b16 %v308
        %v394 = vunpack.c.h.b16 %v308
        %v395 = vunpack.c.l.b16 %v309
        %v396 = vunpack.c.h.b16 %v309
        %v397 = vunpack.c.l.b16 %v310
        %v398 = vunpack.c.h.b16 %v310
        %v399 = vunpack.c.l.b16 %v311
        %v400 = vunpack.c.h.b16 %v311
        %v401 = vunpack.c.l.b16 %v312
        %v402 = vunpack.c.h.b16 %v312
        %v403 = vunpack.c.l.b16 %v313
        %v404 = vunpack.c.h.b16 %v313
        %v405 = vunpack.c.l.b16 %v314
        %v406 = vunpack.c.h.b16 %v314
        %v407 = vunpack.c.l.b16 %v315
        %v408 = vunpack.c.h.b16 %v315
        %v409 = vunpack.c.l.b16 %v316
        %v410 = vunpack.c.h.b16 %v316
        %v411 = vunpack.c.l.b16 %v317
        %v412 = vunpack.c.h.b16 %v317
        %v413 = vunpack.c.l.b16 %v318
        %v414 = vunpack.c.h.b16 %v318
        %v415 = vpack.c.b16 %v355, %v351
        %v416 = vpack.c.b16 %v356, %v352
        %v417 = vpack.c.b16 %v357, %v353
        %v418 = vpack.c.b16 %v358, %v354
        %v419 = vpack.c.b16 %v363, %v359
        %v420 = vpack.c.b16 %v364, %v360
        %v421 = vpack.c.b16 %v365, %v361
        %v422 = vpack.c.b16 %v366, %v362
        %v423 = vpack.c.b16 %v371, %v367
        %v424 = vpack.c.b16 %v372, %v368
        %v425 = vpack.c.b16 %v373, %v369
        %v426 = vpack.c.b16 %v374, %v370
        %v427 = vpack.c.b16 %v379, %v375
        %v428 = vpack.c.b16 %v380, %v376
        %v429 = vpack.c.b16 %v381, %v377
        %v430 = vpack.c.b16 %v382, %v378
        %v431 = vpack.c.b16 %v387, %v383
        %v432 = vpack.c.b16 %v388, %v384
        %v433 = vpack.c.b16 %v389, %v385
        %v434 = vpack.c.b16 %v390, %v386
        %v435 = vpack.c.b16 %v395, %v391
        %v436 = vpack.c.b16 %v396, %v392
        %v437 = vpack.c.b16 %v397, %v393
        %v438 = vpack.c.b16 %v398, %v394
        %v439 = vpack.c.b16 %v403, %v399
        %v440 = vpack.c.b16 %v404, %v400
        %v441 = vpack.c.b16 %v405, %v401
        %v442 = vpack.c.b16 %v406, %v402
        %v443 = vpack.c.b16 %v411, %v407
        %v444 = vpack.c.b16 %v412, %v408
        %v445 = vpack.c.b16 %v413, %v409
        %v446 = vpack.c.b16 %v414, %v410
        %479 = vmatprep.subr.bf16.mxu0 %v416
        %480 = vmatpush1.bf16.msra.mxu0 %v415
        %481 = vmatprep.subr.bf16.mxu0 %v420
        %482 = vmatpush1.bf16.msra.mxu0 %v419
        %483 = vmatprep.subr.bf16.mxu0 %v424
        %484 = vmatpush1.bf16.msra.mxu0 %v423
        %485 = vmatprep.subr.bf16.mxu0 %v428
        %486 = vmatpush1.bf16.msra.mxu0 %v427
        %487 = vmatprep.subr.bf16.mxu0 %v432
        %488 = vmatpush1.bf16.msra.mxu0 %v431
        %489 = vmatprep.subr.bf16.mxu0 %v436
        %490 = vmatpush1.bf16.msra.mxu0 %v435
        %491 = vmatprep.subr.bf16.mxu0 %v440
        %492 = vmatpush1.bf16.msra.mxu0 %v439
        %493 = vmatprep.subr.bf16.mxu0 %v444
        %494 = vmatpush1.bf16.msra.mxu0 %v443
        %495 = vmatprep.subr.bf16.mxu0 0
        %496 = vmatpush1.bf16.msra.mxu0 0
        %497 = vmatprep.subr.bf16.mxu0 0
        %498 = vmatpush1.bf16.msra.mxu0 0
        %499 = vmatprep.subr.bf16.mxu0 0
        %500 = vmatpush1.bf16.msra.mxu0 0
        %501 = vmatprep.subr.bf16.mxu0 0
        %502 = vmatpush1.bf16.msra.mxu0 0
        %503 = vmatprep.subr.bf16.mxu0 0
        %504 = vmatpush1.bf16.msra.mxu0 0
        %505 = vmatprep.subr.bf16.mxu0 0
        %506 = vmatpush1.bf16.msra.mxu0 0
        %507 = vmatprep.subr.bf16.mxu0 0
        %508 = vmatpush1.bf16.msra.mxu0 0
        %509 = vmatprep.subr.bf16.mxu0 0
        %510 = vmatpush1.bf16.msra.mxu0 0
        %511 = vmatprep.mubr.bf16.mxu0 0
        %512 = vmatmul.mubr.bf16.gmra.mrb[0].mxu0 %v279
        %v513 = vpop.f32.mrb[0].mxu0
        %v514 = vadd.f32 0.0, %v513
        %v515 = vpop.f32.mrb[0].mxu0
        %v516 = vadd.f32 0.0, %v515
        %v517 = vpop.f32.mrb[0].mxu0
        %v518 = vadd.f32 0.0, %v517
        %v519 = vpop.f32.mrb[0].mxu0
        %v520 = vadd.f32 0.0, %v519
        %521 = vmatprep.mubr.bf16.mxu0 0
        %522 = vmatmul.mubr.bf16.gmra.mrb[0].mxu0 %v280
        %v523 = vpop.f32.mrb[0].mxu0
        %v524 = vadd.f32 0.0, %v523
        %v525 = vpop.f32.mrb[0].mxu0
        %v526 = vadd.f32 0.0, %v525
        %v527 = vpop.f32.mrb[0].mxu0
        %v528 = vadd.f32 0.0, %v527
        %v529 = vpop.f32.mrb[0].mxu0
        %v530 = vadd.f32 0.0, %v529
        %531 = vmatprep.mubr.bf16.mxu0 0
        %532 = vmatmul.mubr.bf16.gmra.mrb[0].mxu0 %v281
        %v533 = vpop.f32.mrb[0].mxu0
        %v534 = vadd.f32 0.0, %v533
        %v535 = vpop.f32.mrb[0].mxu0
        %v536 = vadd.f32 0.0, %v535
        %v537 = vpop.f32.mrb[0].mxu0
        %v538 = vadd.f32 0.0, %v537
        %v539 = vpop.f32.mrb[0].mxu0
        %v540 = vadd.f32 0.0, %v539
        %541 = vmatprep.mubr.bf16.mxu0 0
        %542 = vmatmul.mubr.bf16.gmra.mrb[0].mxu0 %v282
        %v543 = vpop.f32.mrb[0].mxu0
        %v544 = vadd.f32 0.0, %v543
        %v545 = vpop.f32.mrb[0].mxu0
        %v546 = vadd.f32 0.0, %v545
        %v547 = vpop.f32.mrb[0].mxu0
        %v548 = vadd.f32 0.0, %v547
        %v549 = vpop.f32.mrb[0].mxu0
        %v550 = vadd.f32 0.0, %v549
        %551 = vmatprep.mubr.bf16.mxu0 0
        %552 = vmatmul.mubr.bf16.gmra.mrb[0].mxu0 %v283
        %v553 = vpop.f32.mrb[0].mxu0
        %v554 = vadd.f32 0.0, %v553
        %v555 = vpop.f32.mrb[0].mxu0
        %v556 = vadd.f32 0.0, %v555
        %v557 = vpop.f32.mrb[0].mxu0
        %v558 = vadd.f32 0.0, %v557
        %v559 = vpop.f32.mrb[0].mxu0
        %v560 = vadd.f32 0.0, %v559
        %561 = vmatprep.mubr.bf16.mxu0 0
        %562 = vmatmul.mubr.bf16.gmra.mrb[0].mxu0 %v284
        %v563 = vpop.f32.mrb[0].mxu0
        %v564 = vadd.f32 0.0, %v563
        %v565 = vpop.f32.mrb[0].mxu0
        %v566 = vadd.f32 0.0, %v565
        %v567 = vpop.f32.mrb[0].mxu0
        %v568 = vadd.f32 0.0, %v567
        %v569 = vpop.f32.mrb[0].mxu0
        %v570 = vadd.f32 0.0, %v569
        %571 = vmatprep.mubr.bf16.mxu0 0
        %572 = vmatmul.mubr.bf16.gmra.mrb[0].mxu0 %v285
        %v573 = vpop.f32.mrb[0].mxu0
        %v574 = vadd.f32 0.0, %v573
        %v575 = vpop.f32.mrb[0].mxu0
        %v576 = vadd.f32 0.0, %v575
        %v577 = vpop.f32.mrb[0].mxu0
        %v578 = vadd.f32 0.0, %v577
        %v579 = vpop.f32.mrb[0].mxu0
        %v580 = vadd.f32 0.0, %v579
        %581 = vmatprep.mubr.bf16.mxu0 0
        %582 = vmatmul.mubr.bf16.gmra.mrb[0].mxu0 %v286
        %v583 = vpop.f32.mrb[0].mxu0
        %v584 = vadd.f32 0.0, %v583
        %v585 = vpop.f32.mrb[0].mxu0
        %v586 = vadd.f32 0.0, %v585
        %v587 = vpop.f32.mrb[0].mxu0
        %v588 = vadd.f32 0.0, %v587
        %v589 = vpop.f32.mrb[0].mxu0
        %v590 = vadd.f32 0.0, %v589
        %591 = vdwg.mxu0
        %592 = vmatprep.subr.bf16.mxu0 %v418
        %593 = vmatpush1.bf16.msra.mxu0 %v417
        %594 = vmatprep.subr.bf16.mxu0 %v422
        %595 = vmatpush1.bf16.msra.mxu0 %v421
        %596 = vmatprep.subr.bf16.mxu0 %v426
        %597 = vmatpush1.bf16.msra.mxu0 %v425
        %598 = vmatprep.subr.bf16.mxu0 %v430
        %599 = vmatpush1.bf16.msra.mxu0 %v429
        %600 = vmatprep.subr.bf16.mxu0 %v434
        %601 = vmatpush1.bf16.msra.mxu0 %v433
        %602 = vmatprep.subr.bf16.mxu0 %v438
        %603 = vmatpush1.bf16.msra.mxu0 %v437
        %604 = vmatprep.subr.bf16.mxu0 %v442
        %605 = vmatpush1.bf16.msra.mxu0 %v441
        %606 = vmatprep.subr.bf16.mxu0 %v446
        %607 = vmatpush1.bf16.msra.mxu0 %v445
        %608 = vmatprep.subr.bf16.mxu0 0
        %609 = vmatpush1.bf16.msra.mxu0 0
        %610 = vmatprep.subr.bf16.mxu0 0
        %611 = vmatpush1.bf16.msra.mxu0 0
        %612 = vmatprep.subr.bf16.mxu0 0
        %613 = vmatpush1.bf16.msra.mxu0 0
        %614 = vmatprep.subr.bf16.mxu0 0
        %615 = vmatpush1.bf16.msra.mxu0 0
        %616 = vmatprep.subr.bf16.mxu0 0
        %617 = vmatpush1.bf16.msra.mxu0 0
        %618 = vmatprep.subr.bf16.mxu0 0
        %619 = vmatpush1.bf16.msra.mxu0 0
        %620 = vmatprep.subr.bf16.mxu0 0
        %621 = vmatpush1.bf16.msra.mxu0 0
        %622 = vmatprep.subr.bf16.mxu0 0
        %623 = vmatpush1.bf16.msra.mxu0 0
        %624 = vmatprep.mubr.bf16.mxu0 0
        %625 = vmatmul.mubr.bf16.gmra.mrb[0].mxu0 %v279
        %v626 = vpop.f32.mrb[0].mxu0
        %v627 = vadd.f32 0.0, %v626
        %v628 = vpop.f32.mrb[0].mxu0
        %v629 = vadd.f32 0.0, %v628
        %v630 = vpop.f32.mrb[0].mxu0
        %v631 = vadd.f32 0.0, %v630
        %v632 = vpop.f32.mrb[0].mxu0
        %v633 = vadd.f32 0.0, %v632
        %634 = vmatprep.mubr.bf16.mxu0 0
        %635 = vmatmul.mubr.bf16.gmra.mrb[0].mxu0 %v280
        %v636 = vpop.f32.mrb[0].mxu0
        %v637 = vadd.f32 0.0, %v636
        %v638 = vpop.f32.mrb[0].mxu0
        %v639 = vadd.f32 0.0, %v638
        %v640 = vpop.f32.mrb[0].mxu0
        %v641 = vadd.f32 0.0, %v640
        %v642 = vpop.f32.mrb[0].mxu0
        %v643 = vadd.f32 0.0, %v642
        %644 = vmatprep.mubr.bf16.mxu0 0
        %645 = vmatmul.mubr.bf16.gmra.mrb[0].mxu0 %v281
        %v646 = vpop.f32.mrb[0].mxu0
        %v647 = vadd.f32 0.0, %v646
        %v648 = vpop.f32.mrb[0].mxu0
        %v649 = vadd.f32 0.0, %v648
        %v650 = vpop.f32.mrb[0].mxu0
        %v651 = vadd.f32 0.0, %v650
        %v652 = vpop.f32.mrb[0].mxu0
        %v653 = vadd.f32 0.0, %v652
        %654 = vmatprep.mubr.bf16.mxu0 0
        %655 = vmatmul.mubr.bf16.gmra.mrb[0].mxu0 %v282
        %v656 = vpop.f32.mrb[0].mxu0
        %v657 = vadd.f32 0.0, %v656
        %v658 = vpop.f32.mrb[0].mxu0
        %v659 = vadd.f32 0.0, %v658
        %v660 = vpop.f32.mrb[0].mxu0
        %v661 = vadd.f32 0.0, %v660
        %v662 = vpop.f32.mrb[0].mxu0
        %v663 = vadd.f32 0.0, %v662
        %664 = vmatprep.mubr.bf16.mxu0 0
        %665 = vmatmul.mubr.bf16.gmra.mrb[0].mxu0 %v283
        %v666 = vpop.f32.mrb[0].mxu0
        %v667 = vadd.f32 0.0, %v666
        %v668 = vpop.f32.mrb[0].mxu0
        %v669 = vadd.f32 0.0, %v668
        %v670 = vpop.f32.mrb[0].mxu0
        %v671 = vadd.f32 0.0, %v670
        %v672 = vpop.f32.mrb[0].mxu0
        %v673 = vadd.f32 0.0, %v672
        %674 = vmatprep.mubr.bf16.mxu0 0
        %675 = vmatmul.mubr.bf16.gmra.mrb[0].mxu0 %v284
        %v676 = vpop.f32.mrb[0].mxu0
        %v677 = vadd.f32 0.0, %v676
        %v678 = vpop.f32.mrb[0].mxu0
        %v679 = vadd.f32 0.0, %v678
        %v680 = vpop.f32.mrb[0].mxu0
        %v681 = vadd.f32 0.0, %v680
        %v682 = vpop.f32.mrb[0].mxu0
        %v683 = vadd.f32 0.0, %v682
        %684 = vmatprep.mubr.bf16.mxu0 0
        %685 = vmatmul.mubr.bf16.gmra.mrb[0].mxu0 %v285
        %v686 = vpop.f32.mrb[0].mxu0
        %v687 = vadd.f32 0.0, %v686
        %v688 = vpop.f32.mrb[0].mxu0
        %v689 = vadd.f32 0.0, %v688
        %v690 = vpop.f32.mrb[0].mxu0
        %v691 = vadd.f32 0.0, %v690
        %v692 = vpop.f32.mrb[0].mxu0
        %v693 = vadd.f32 0.0, %v692
        %694 = vmatprep.mubr.bf16.mxu0 0
        %695 = vmatmul.mubr.bf16.gmra.mrb[0].mxu0 %v286
        %v696 = vpop.f32.mrb[0].mxu0
        %v697 = vadd.f32 0.0, %v696
        %v698 = vpop.f32.mrb[0].mxu0
        %v699 = vadd.f32 0.0, %v698
        %v700 = vpop.f32.mrb[0].mxu0
        %v701 = vadd.f32 0.0, %v700
        %v702 = vpop.f32.mrb[0].mxu0
        %v703 = vadd.f32 0.0, %v702
        %704 = vdwg.mxu0
        %v705 = vlaneseq
        %v706 = vshrl.u32 %v705, 7
        %v707 = vsub.s32 6, %v706
        %v708 = vrot.slane %v261, %v707
        %v709 = vlaneseq
        %v710 = vshrl.u32 %v709, 7
        %v711 = vsub.s32 6, %v710
        %v712 = vrot.slane %v262, %v711
        %v713 = vadd.f32 %v514, %v708
        %v714 = vadd.f32 %v516, %v712
        %v715 = vadd.f32 %v518, %v708
        %v716 = vadd.f32 %v520, %v712
        %v717 = vadd.f32 %v524, %v708
        %v718 = vadd.f32 %v526, %v712
        %v719 = vadd.f32 %v528, %v708
        %v720 = vadd.f32 %v530, %v712
        %v721 = vadd.f32 %v534, %v708
        %v722 = vadd.f32 %v536, %v712
        %v723 = vadd.f32 %v538, %v708
        %v724 = vadd.f32 %v540, %v712
        %v725 = vadd.f32 %v544, %v708
        %v726 = vadd.f32 %v546, %v712
        %v727 = vadd.f32 %v548, %v708
        %v728 = vadd.f32 %v550, %v712
        %v729 = vadd.f32 %v554, %v708
        %v730 = vadd.f32 %v556, %v712
        %v731 = vadd.f32 %v558, %v708
        %v732 = vadd.f32 %v560, %v712
        %v733 = vadd.f32 %v564, %v708
        %v734 = vadd.f32 %v566, %v712
        %v735 = vadd.f32 %v568, %v708
        %v736 = vadd.f32 %v570, %v712
        %v737 = vadd.f32 %v574, %v708
        %v738 = vadd.f32 %v576, %v712
        %v739 = vadd.f32 %v578, %v708
        %v740 = vadd.f32 %v580, %v712
        %v741 = vadd.f32 %v584, %v708
        %v742 = vadd.f32 %v586, %v712
        %v743 = vadd.f32 %v588, %v708
        %v744 = vadd.f32 %v590, %v712
        %v745 = vlaneseq
        %v746 = vshrl.u32 %v745, 7
        %v747 = vsub.s32 0, %v746
        %v748 = vrot.slane %v261, %v747
        %v749 = vlaneseq
        %v750 = vshrl.u32 %v749, 7
        %v751 = vsub.s32 0, %v750
        %v752 = vrot.slane %v262, %v751
        %v753 = vadd.f32 %v627, %v748
        %v754 = vadd.f32 %v629, %v752
        %v755 = vadd.f32 %v631, %v748
        %v756 = vadd.f32 %v633, %v752
        %v757 = vadd.f32 %v637, %v748
        %v758 = vadd.f32 %v639, %v752
        %v759 = vadd.f32 %v641, %v748
        %v760 = vadd.f32 %v643, %v752
        %v761 = vadd.f32 %v647, %v748
        %v762 = vadd.f32 %v649, %v752
        %v763 = vadd.f32 %v651, %v748
        %v764 = vadd.f32 %v653, %v752
        %v765 = vadd.f32 %v657, %v748
        %v766 = vadd.f32 %v659, %v752
        %v767 = vadd.f32 %v661, %v748
        %v768 = vadd.f32 %v663, %v752
        %v769 = vadd.f32 %v667, %v748
        %v770 = vadd.f32 %v669, %v752
        %v771 = vadd.f32 %v671, %v748
        %v772 = vadd.f32 %v673, %v752
        %v773 = vadd.f32 %v677, %v748
        %v774 = vadd.f32 %v679, %v752
        %v775 = vadd.f32 %v681, %v748
        %v776 = vadd.f32 %v683, %v752
        %v777 = vadd.f32 %v687, %v748
        %v778 = vadd.f32 %v689, %v752
        %v779 = vadd.f32 %v691, %v748
        %v780 = vadd.f32 %v693, %v752
        %v781 = vadd.f32 %v697, %v748
        %v782 = vadd.f32 %v699, %v752
        %v783 = vadd.f32 %v701, %v748
        %v784 = vadd.f32 %v703, %v752
        %v785 = vadd.f32 %v753, %v754
        %786 = vadd.xlane.f32.xlu0 %v785
        %v787 = vpop.xlane.xlu0 %786
        %v788 = vadd.f32 %v755, %v756
        %789 = vadd.xlane.f32.xlu0 %v788
        %v790 = vpop.xlane.xlu0 %789
        %v791 = vadd.f32 %v757, %v758
        %792 = vadd.xlane.f32.xlu0 %v791
        %v793 = vpop.xlane.xlu0 %792
        %v794 = vadd.f32 %v759, %v760
        %795 = vadd.xlane.f32.xlu0 %v794
        %v796 = vpop.xlane.xlu0 %795
        %v797 = vadd.f32 %v761, %v762
        %798 = vadd.xlane.f32.xlu0 %v797
        %v799 = vpop.xlane.xlu0 %798
        %v800 = vadd.f32 %v763, %v764
        %801 = vadd.xlane.f32.xlu0 %v800
        %v802 = vpop.xlane.xlu0 %801
        %v803 = vadd.f32 %v765, %v766
        %804 = vadd.xlane.f32.xlu0 %v803
        %v805 = vpop.xlane.xlu0 %804
        %v806 = vadd.f32 %v767, %v768
        %807 = vadd.xlane.f32.xlu0 %v806
        %v808 = vpop.xlane.xlu0 %807
        %v809 = vadd.f32 %v769, %v770
        %810 = vadd.xlane.f32.xlu0 %v809
        %v811 = vpop.xlane.xlu0 %810
        %v812 = vadd.f32 %v771, %v772
        %813 = vadd.xlane.f32.xlu0 %v812
        %v814 = vpop.xlane.xlu0 %813
        %v815 = vadd.f32 %v773, %v774
        %816 = vadd.xlane.f32.xlu0 %v815
        %v817 = vpop.xlane.xlu0 %816
        %v818 = vadd.f32 %v775, %v776
        %819 = vadd.xlane.f32.xlu0 %v818
        %v820 = vpop.xlane.xlu0 %819
        %v821 = vadd.f32 %v777, %v778
        %822 = vadd.xlane.f32.xlu0 %v821
        %v823 = vpop.xlane.xlu0 %822
        %v824 = vadd.f32 %v779, %v780
        %825 = vadd.xlane.f32.xlu0 %v824
        %v826 = vpop.xlane.xlu0 %825
        %v827 = vadd.f32 %v781, %v782
        %828 = vadd.xlane.f32.xlu0 %v827
        %v829 = vpop.xlane.xlu0 %828
        %v830 = vadd.f32 %v783, %v784
        %831 = vadd.xlane.f32.xlu0 %v830
        %v832 = vpop.xlane.xlu0 %831
        %v833 = vrcp.pop 256.0
        %v834 = vmul.f32 %v787, %v833
        %v835 = vmul.f32 %v790, %v833
        %v836 = vmul.f32 %v793, %v833
        %v837 = vmul.f32 %v796, %v833
        %v838 = vmul.f32 %v799, %v833
        %v839 = vmul.f32 %v802, %v833
        %v840 = vmul.f32 %v805, %v833
        %v841 = vmul.f32 %v808, %v833
        %v842 = vmul.f32 %v811, %v833
        %v843 = vmul.f32 %v814, %v833
        %v844 = vmul.f32 %v817, %v833
        %v845 = vmul.f32 %v820, %v833
        %v846 = vmul.f32 %v823, %v833
        %v847 = vmul.f32 %v826, %v833
        %v848 = vmul.f32 %v829, %v833
        %v849 = vmul.f32 %v832, %v833
        %v850 = vmul.f32 %v753, %v753
        %v851 = vmul.f32 %v754, %v754
        %v852 = vmul.f32 %v755, %v755
        %v853 = vmul.f32 %v756, %v756
        %v854 = vmul.f32 %v757, %v757
        %v855 = vmul.f32 %v758, %v758
        %v856 = vmul.f32 %v759, %v759
        %v857 = vmul.f32 %v760, %v760
        %v858 = vmul.f32 %v761, %v761
        %v859 = vmul.f32 %v762, %v762
        %v860 = vmul.f32 %v763, %v763
        %v861 = vmul.f32 %v764, %v764
        %v862 = vmul.f32 %v765, %v765
        %v863 = vmul.f32 %v766, %v766
        %v864 = vmul.f32 %v767, %v767
        %v865 = vmul.f32 %v768, %v768
        %v866 = vmul.f32 %v769, %v769
        %v867 = vmul.f32 %v770, %v770
        %v868 = vmul.f32 %v771, %v771
        %v869 = vmul.f32 %v772, %v772
        %v870 = vmul.f32 %v773, %v773
        %v871 = vmul.f32 %v774, %v774
        %v872 = vmul.f32 %v775, %v775
        %v873 = vmul.f32 %v776, %v776
        %v874 = vmul.f32 %v777, %v777
        %v875 = vmul.f32 %v778, %v778
        %v876 = vmul.f32 %v779, %v779
        %v877 = vmul.f32 %v780, %v780
        %v878 = vmul.f32 %v781, %v781
        %v879 = vmul.f32 %v782, %v782
        %v880 = vmul.f32 %v783, %v783
        %v881 = vmul.f32 %v784, %v784
        %v882 = vadd.f32 %v850, %v851
        %883 = vadd.xlane.f32.xlu0 %v882
        %v884 = vpop.xlane.xlu0 %883
        %v885 = vadd.f32 %v852, %v853
        %886 = vadd.xlane.f32.xlu0 %v885
        %v887 = vpop.xlane.xlu0 %886
        %v888 = vadd.f32 %v854, %v855
        %889 = vadd.xlane.f32.xlu0 %v888
        %v890 = vpop.xlane.xlu0 %889
        %v891 = vadd.f32 %v856, %v857
        %892 = vadd.xlane.f32.xlu0 %v891
        %v893 = vpop.xlane.xlu0 %892
        %v894 = vadd.f32 %v858, %v859
        %895 = vadd.xlane.f32.xlu0 %v894
        %v896 = vpop.xlane.xlu0 %895
        %v897 = vadd.f32 %v860, %v861
        %898 = vadd.xlane.f32.xlu0 %v897
        %v899 = vpop.xlane.xlu0 %898
        %v900 = vadd.f32 %v862, %v863
        %901 = vadd.xlane.f32.xlu0 %v900
        %v902 = vpop.xlane.xlu0 %901
        %v903 = vadd.f32 %v864, %v865
        %904 = vadd.xlane.f32.xlu0 %v903
        %v905 = vpop.xlane.xlu0 %904
        %v906 = vadd.f32 %v866, %v867
        %907 = vadd.xlane.f32.xlu0 %v906
        %v908 = vpop.xlane.xlu0 %907
        %v909 = vadd.f32 %v868, %v869
        %910 = vadd.xlane.f32.xlu0 %v909
        %v911 = vpop.xlane.xlu0 %910
        %v912 = vadd.f32 %v870, %v871
        %913 = vadd.xlane.f32.xlu0 %v912
        %v914 = vpop.xlane.xlu0 %913
        %v915 = vadd.f32 %v872, %v873
        %916 = vadd.xlane.f32.xlu0 %v915
        %v917 = vpop.xlane.xlu0 %916
        %v918 = vadd.f32 %v874, %v875
        %919 = vadd.xlane.f32.xlu0 %v918
        %v920 = vpop.xlane.xlu0 %919
        %v921 = vadd.f32 %v876, %v877
        %922 = vadd.xlane.f32.xlu0 %v921
        %v923 = vpop.xlane.xlu0 %922
        %v924 = vadd.f32 %v878, %v879
        %925 = vadd.xlane.f32.xlu0 %v924
        %v926 = vpop.xlane.xlu0 %925
        %v927 = vadd.f32 %v880, %v881
        %928 = vadd.xlane.f32.xlu0 %v927
        %v929 = vpop.xlane.xlu0 %928
        %v930 = vmul.f32 %v884, %v833
        %v931 = vmul.f32 %v887, %v833
        %v932 = vmul.f32 %v890, %v833
        %v933 = vmul.f32 %v893, %v833
        %v934 = vmul.f32 %v896, %v833
        %v935 = vmul.f32 %v899, %v833
        %v936 = vmul.f32 %v902, %v833
        %v937 = vmul.f32 %v905, %v833
        %v938 = vmul.f32 %v908, %v833
        %v939 = vmul.f32 %v911, %v833
        %v940 = vmul.f32 %v914, %v833
        %v941 = vmul.f32 %v917, %v833
        %v942 = vmul.f32 %v920, %v833
        %v943 = vmul.f32 %v923, %v833
        %v944 = vmul.f32 %v926, %v833
        %v945 = vmul.f32 %v929, %v833
        %v946 = vmul.f32 %v834, %v834
        %v947 = vmul.f32 %v835, %v835
        %v948 = vmul.f32 %v836, %v836
        %v949 = vmul.f32 %v837, %v837
        %v950 = vmul.f32 %v838, %v838
        %v951 = vmul.f32 %v839, %v839
        %v952 = vmul.f32 %v840, %v840
        %v953 = vmul.f32 %v841, %v841
        %v954 = vmul.f32 %v842, %v842
        %v955 = vmul.f32 %v843, %v843
        %v956 = vmul.f32 %v844, %v844
        %v957 = vmul.f32 %v845, %v845
        %v958 = vmul.f32 %v846, %v846
        %v959 = vmul.f32 %v847, %v847
        %v960 = vmul.f32 %v848, %v848
        %v961 = vmul.f32 %v849, %v849
        %v962 = vsub.f32 %v930, %v946
        %v963 = vsub.f32 %v931, %v947
        %v964 = vsub.f32 %v932, %v948
        %v965 = vsub.f32 %v933, %v949
        %v966 = vsub.f32 %v934, %v950
        %v967 = vsub.f32 %v935, %v951
        %v968 = vsub.f32 %v936, %v952
        %v969 = vsub.f32 %v937, %v953
        %v970 = vsub.f32 %v938, %v954
        %v971 = vsub.f32 %v939, %v955
        %v972 = vsub.f32 %v940, %v956
        %v973 = vsub.f32 %v941, %v957
        %v974 = vsub.f32 %v942, %v958
        %v975 = vsub.f32 %v943, %v959
        %v976 = vsub.f32 %v944, %v960
        %v977 = vsub.f32 %v945, %v961
        %v978 = vmax.f32 %v962, 0.0
        %v979 = vmax.f32 %v963, 0.0
        %v980 = vmax.f32 %v964, 0.0
        %v981 = vmax.f32 %v965, 0.0
        %v982 = vmax.f32 %v966, 0.0
        %v983 = vmax.f32 %v967, 0.0
        %v984 = vmax.f32 %v968, 0.0
        %v985 = vmax.f32 %v969, 0.0
        %v986 = vmax.f32 %v970, 0.0
        %v987 = vmax.f32 %v971, 0.0
        %v988 = vmax.f32 %v972, 0.0
        %v989 = vmax.f32 %v973, 0.0
        %v990 = vmax.f32 %v974, 0.0
        %v991 = vmax.f32 %v975, 0.0
        %v992 = vmax.f32 %v976, 0.0
        %v993 = vmax.f32 %v977, 0.0
        %v994 = vsub.f32 %v753, %v834
        %v995 = vsub.f32 %v754, %v834
        %v996 = vsub.f32 %v755, %v835
        %v997 = vsub.f32 %v756, %v835
        %v998 = vsub.f32 %v757, %v836
        %v999 = vsub.f32 %v758, %v836
        %v1000 = vsub.f32 %v759, %v837
        %v1001 = vsub.f32 %v760, %v837
        %v1002 = vsub.f32 %v761, %v838
        %v1003 = vsub.f32 %v762, %v838
        %v1004 = vsub.f32 %v763, %v839
        %v1005 = vsub.f32 %v764, %v839
        %v1006 = vsub.f32 %v765, %v840
        %v1007 = vsub.f32 %v766, %v840
        %v1008 = vsub.f32 %v767, %v841
        %v1009 = vsub.f32 %v768, %v841
        %v1010 = vsub.f32 %v769, %v842
        %v1011 = vsub.f32 %v770, %v842
        %v1012 = vsub.f32 %v771, %v843
        %v1013 = vsub.f32 %v772, %v843
        %v1014 = vsub.f32 %v773, %v844
        %v1015 = vsub.f32 %v774, %v844
        %v1016 = vsub.f32 %v775, %v845
        %v1017 = vsub.f32 %v776, %v845
        %v1018 = vsub.f32 %v777, %v846
        %v1019 = vsub.f32 %v778, %v846
        %v1020 = vsub.f32 %v779, %v847
        %v1021 = vsub.f32 %v780, %v847
        %v1022 = vsub.f32 %v781, %v848
        %v1023 = vsub.f32 %v782, %v848
        %v1024 = vsub.f32 %v783, %v849
        %v1025 = vsub.f32 %v784, %v849
        %v1026 = vadd.f32 %v978, 1e-05
        %v1027 = vadd.f32 %v979, 1e-05
        %v1028 = vadd.f32 %v980, 1e-05
        %v1029 = vadd.f32 %v981, 1e-05
        %v1030 = vadd.f32 %v982, 1e-05
        %v1031 = vadd.f32 %v983, 1e-05
        %v1032 = vadd.f32 %v984, 1e-05
        %v1033 = vadd.f32 %v985, 1e-05
        %v1034 = vadd.f32 %v986, 1e-05
        %v1035 = vadd.f32 %v987, 1e-05
        %v1036 = vadd.f32 %v988, 1e-05
        %v1037 = vadd.f32 %v989, 1e-05
        %v1038 = vadd.f32 %v990, 1e-05
        %v1039 = vadd.f32 %v991, 1e-05
        %v1040 = vadd.f32 %v992, 1e-05
        %v1041 = vadd.f32 %v993, 1e-05
        %v1042 = vrsqrt.pop %v1026
        %v1043 = vrsqrt.pop %v1027
        %v1044 = vrsqrt.pop %v1028
        %v1045 = vrsqrt.pop %v1029
        %v1046 = vrsqrt.pop %v1030
        %v1047 = vrsqrt.pop %v1031
        %v1048 = vrsqrt.pop %v1032
        %v1049 = vrsqrt.pop %v1033
        %v1050 = vrsqrt.pop %v1034
        %v1051 = vrsqrt.pop %v1035
        %v1052 = vrsqrt.pop %v1036
        %v1053 = vrsqrt.pop %v1037
        %v1054 = vrsqrt.pop %v1038
        %v1055 = vrsqrt.pop %v1039
        %v1056 = vrsqrt.pop %v1040
        %v1057 = vrsqrt.pop %v1041
        %v1058 = vmul.f32 %v994, %v1042
        %v1059 = vmul.f32 %v995, %v1042
        %v1060 = vmul.f32 %v996, %v1043
        %v1061 = vmul.f32 %v997, %v1043
        %v1062 = vmul.f32 %v998, %v1044
        %v1063 = vmul.f32 %v999, %v1044
        %v1064 = vmul.f32 %v1000, %v1045
        %v1065 = vmul.f32 %v1001, %v1045
        %v1066 = vmul.f32 %v1002, %v1046
        %v1067 = vmul.f32 %v1003, %v1046
        %v1068 = vmul.f32 %v1004, %v1047
        %v1069 = vmul.f32 %v1005, %v1047
        %v1070 = vmul.f32 %v1006, %v1048
        %v1071 = vmul.f32 %v1007, %v1048
        %v1072 = vmul.f32 %v1008, %v1049
        %v1073 = vmul.f32 %v1009, %v1049
        %v1074 = vmul.f32 %v1010, %v1050
        %v1075 = vmul.f32 %v1011, %v1050
        %v1076 = vmul.f32 %v1012, %v1051
        %v1077 = vmul.f32 %v1013, %v1051
        %v1078 = vmul.f32 %v1014, %v1052
        %v1079 = vmul.f32 %v1015, %v1052
        %v1080 = vmul.f32 %v1016, %v1053
        %v1081 = vmul.f32 %v1017, %v1053
        %v1082 = vmul.f32 %v1018, %v1054
        %v1083 = vmul.f32 %v1019, %v1054
        %v1084 = vmul.f32 %v1020, %v1055
        %v1085 = vmul.f32 %v1021, %v1055
        %v1086 = vmul.f32 %v1022, %v1056
        %v1087 = vmul.f32 %v1023, %v1056
        %v1088 = vmul.f32 %v1024, %v1057
        %v1089 = vmul.f32 %v1025, %v1057
        %v1090 = vlaneseq
        %v1091 = vshrl.u32 %v1090, 7
        %v1092 = vsub.s32 1, %v1091
        %v1093 = vrot.slane %v261, %v1092
        %v1094 = vlaneseq
        %v1095 = vshrl.u32 %v1094, 7
        %v1096 = vsub.s32 1, %v1095
        %v1097 = vrot.slane %v262, %v1096
        %v1098 = vmul.f32 %v1058, %v1093
        %v1099 = vmul.f32 %v1059, %v1097
        %v1100 = vmul.f32 %v1060, %v1093
        %v1101 = vmul.f32 %v1061, %v1097
        %v1102 = vmul.f32 %v1062, %v1093
        %v1103 = vmul.f32 %v1063, %v1097
        %v1104 = vmul.f32 %v1064, %v1093
        %v1105 = vmul.f32 %v1065, %v1097
        %v1106 = vmul.f32 %v1066, %v1093
        %v1107 = vmul.f32 %v1067, %v1097
        %v1108 = vmul.f32 %v1068, %v1093
        %v1109 = vmul.f32 %v1069, %v1097
        %v1110 = vmul.f32 %v1070, %v1093
        %v1111 = vmul.f32 %v1071, %v1097
        %v1112 = vmul.f32 %v1072, %v1093
        %v1113 = vmul.f32 %v1073, %v1097
        %v1114 = vmul.f32 %v1074, %v1093
        %v1115 = vmul.f32 %v1075, %v1097
        %v1116 = vmul.f32 %v1076, %v1093
        %v1117 = vmul.f32 %v1077, %v1097
        %v1118 = vmul.f32 %v1078, %v1093
        %v1119 = vmul.f32 %v1079, %v1097
        %v1120 = vmul.f32 %v1080, %v1093
        %v1121 = vmul.f32 %v1081, %v1097
        %v1122 = vmul.f32 %v1082, %v1093
        %v1123 = vmul.f32 %v1083, %v1097
        %v1124 = vmul.f32 %v1084, %v1093
        %v1125 = vmul.f32 %v1085, %v1097
        %v1126 = vmul.f32 %v1086, %v1093
        %v1127 = vmul.f32 %v1087, %v1097
        %v1128 = vmul.f32 %v1088, %v1093
        %v1129 = vmul.f32 %v1089, %v1097
        %v1130 = vlaneseq
        %v1131 = vshrl.u32 %v1130, 7
        %v1132 = vsub.s32 2, %v1131
        %v1133 = vrot.slane %v261, %v1132
        %v1134 = vlaneseq
        %v1135 = vshrl.u32 %v1134, 7
        %v1136 = vsub.s32 2, %v1135
        %v1137 = vrot.slane %v262, %v1136
        %v1138 = vadd.f32 %v1098, %v1133
        %v1139 = vadd.f32 %v1099, %v1137
        %v1140 = vadd.f32 %v1100, %v1133
        %v1141 = vadd.f32 %v1101, %v1137
        %v1142 = vadd.f32 %v1102, %v1133
        %v1143 = vadd.f32 %v1103, %v1137
        %v1144 = vadd.f32 %v1104, %v1133
        %v1145 = vadd.f32 %v1105, %v1137
        %v1146 = vadd.f32 %v1106, %v1133
        %v1147 = vadd.f32 %v1107, %v1137
        %v1148 = vadd.f32 %v1108, %v1133
        %v1149 = vadd.f32 %v1109, %v1137
        %v1150 = vadd.f32 %v1110, %v1133
        %v1151 = vadd.f32 %v1111, %v1137
        %v1152 = vadd.f32 %v1112, %v1133
        %v1153 = vadd.f32 %v1113, %v1137
        %v1154 = vadd.f32 %v1114, %v1133
        %v1155 = vadd.f32 %v1115, %v1137
        %v1156 = vadd.f32 %v1116, %v1133
        %v1157 = vadd.f32 %v1117, %v1137
        %v1158 = vadd.f32 %v1118, %v1133
        %v1159 = vadd.f32 %v1119, %v1137
        %v1160 = vadd.f32 %v1120, %v1133
        %v1161 = vadd.f32 %v1121, %v1137
        %v1162 = vadd.f32 %v1122, %v1133
        %v1163 = vadd.f32 %v1123, %v1137
        %v1164 = vadd.f32 %v1124, %v1133
        %v1165 = vadd.f32 %v1125, %v1137
        %v1166 = vadd.f32 %v1126, %v1133
        %v1167 = vadd.f32 %v1127, %v1137
        %v1168 = vadd.f32 %v1128, %v1133
        %v1169 = vadd.f32 %v1129, %v1137
        %v1170 = vmax.f32 %v1138, 0.0
        %v1171 = vmax.f32 %v1139, 0.0
        %v1172 = vmax.f32 %v1140, 0.0
        %v1173 = vmax.f32 %v1141, 0.0
        %v1174 = vmax.f32 %v1142, 0.0
        %v1175 = vmax.f32 %v1143, 0.0
        %v1176 = vmax.f32 %v1144, 0.0
        %v1177 = vmax.f32 %v1145, 0.0
        %v1178 = vmax.f32 %v1146, 0.0
        %v1179 = vmax.f32 %v1147, 0.0
        %v1180 = vmax.f32 %v1148, 0.0
        %v1181 = vmax.f32 %v1149, 0.0
        %v1182 = vmax.f32 %v1150, 0.0
        %v1183 = vmax.f32 %v1151, 0.0
        %v1184 = vmax.f32 %v1152, 0.0
        %v1185 = vmax.f32 %v1153, 0.0
        %v1186 = vmax.f32 %v1154, 0.0
        %v1187 = vmax.f32 %v1155, 0.0
        %v1188 = vmax.f32 %v1156, 0.0
        %v1189 = vmax.f32 %v1157, 0.0
        %v1190 = vmax.f32 %v1158, 0.0
        %v1191 = vmax.f32 %v1159, 0.0
        %v1192 = vmax.f32 %v1160, 0.0
        %v1193 = vmax.f32 %v1161, 0.0
        %v1194 = vmax.f32 %v1162, 0.0
        %v1195 = vmax.f32 %v1163, 0.0
        %v1196 = vmax.f32 %v1164, 0.0
        %v1197 = vmax.f32 %v1165, 0.0
        %v1198 = vmax.f32 %v1166, 0.0
        %v1199 = vmax.f32 %v1167, 0.0
        %v1200 = vmax.f32 %v1168, 0.0
        %v1201 = vmax.f32 %v1169, 0.0
        %v1202 = vpack.c.bf16 %v1172, %v1170
        %v1203 = vpack.c.bf16 %v1173, %v1171
        %v1204 = vpack.c.bf16 %v1176, %v1174
        %v1205 = vpack.c.bf16 %v1177, %v1175
        %v1206 = vpack.c.bf16 %v1180, %v1178
        %v1207 = vpack.c.bf16 %v1181, %v1179
        %v1208 = vpack.c.bf16 %v1184, %v1182
        %v1209 = vpack.c.bf16 %v1185, %v1183
        %v1210 = vpack.c.bf16 %v1188, %v1186
        %v1211 = vpack.c.bf16 %v1189, %v1187
        %v1212 = vpack.c.bf16 %v1192, %v1190
        %v1213 = vpack.c.bf16 %v1193, %v1191
        %v1214 = vpack.c.bf16 %v1196, %v1194
        %v1215 = vpack.c.bf16 %v1197, %v1195
        %v1216 = vpack.c.bf16 %v1200, %v1198
        %v1217 = vpack.c.bf16 %v1201, %v1199
        %v1218 = vld [vmem:[#allocation7] sm:$0xff]
        %v1219 = vld [vmem:[#allocation7 + $0x8] sm:$0xff]
        %v1220 = vld [vmem:[#allocation7 + $0x10] sm:$0xff]
        %v1221 = vld [vmem:[#allocation7 + $0x18] sm:$0xff]
        %v1222 = vld [vmem:[#allocation7 + $0x20] sm:$0xff]
        %v1223 = vld [vmem:[#allocation7 + $0x28] sm:$0xff]
        %v1224 = vld [vmem:[#allocation7 + $0x30] sm:$0xff]
        %v1225 = vld [vmem:[#allocation7 + $0x38] sm:$0xff]
        %v1226 = vld [vmem:[#allocation7 + $0x40] sm:$0xff]
        %v1227 = vld [vmem:[#allocation7 + $0x48] sm:$0xff]
        %v1228 = vld [vmem:[#allocation7 + $0x50] sm:$0xff]
        %v1229 = vld [vmem:[#allocation7 + $0x58] sm:$0xff]
        %v1230 = vld [vmem:[#allocation7 + $0x60] sm:$0xff]
        %v1231 = vld [vmem:[#allocation7 + $0x68] sm:$0xff]
        %v1232 = vld [vmem:[#allocation7 + $0x70] sm:$0xff]
        %v1233 = vld [vmem:[#allocation7 + $0x78] sm:$0xff]
        %v1234 = vld [vmem:[#allocation7 + $0x80] sm:$0xff]
        %v1235 = vld [vmem:[#allocation7 + $0x88] sm:$0xff]
        %v1236 = vld [vmem:[#allocation7 + $0x90] sm:$0xff]
        %v1237 = vld [vmem:[#allocation7 + $0x98] sm:$0xff]
        %v1238 = vld [vmem:[#allocation7 + $0xa0] sm:$0xff]
        %v1239 = vld [vmem:[#allocation7 + $0xa8] sm:$0xff]
        %v1240 = vld [vmem:[#allocation7 + $0xb0] sm:$0xff]
        %v1241 = vld [vmem:[#allocation7 + $0xb8] sm:$0xff]
        %v1242 = vld [vmem:[#allocation7 + $0xc0] sm:$0xff]
        %v1243 = vld [vmem:[#allocation7 + $0xc8] sm:$0xff]
        %v1244 = vld [vmem:[#allocation7 + $0xd0] sm:$0xff]
        %v1245 = vld [vmem:[#allocation7 + $0xd8] sm:$0xff]
        %v1246 = vld [vmem:[#allocation7 + $0xe0] sm:$0xff]
        %v1247 = vld [vmem:[#allocation7 + $0xe8] sm:$0xff]
        %v1248 = vld [vmem:[#allocation7 + $0xf0] sm:$0xff]
        %v1249 = vld [vmem:[#allocation7 + $0xf8] sm:$0xff]
        %v1250 = vlaneseq
        %v1251 = vshrl.u32 %v1250, 7
        %v1252 = vsub.s32 3, %v1251
        %v1253 = vrot.slane %v261, %v1252
        %v1254 = vlaneseq
        %v1255 = vshrl.u32 %v1254, 7
        %v1256 = vsub.s32 3, %v1255
        %v1257 = vrot.slane %v262, %v1256
        %v1290 = vunpack.c.l.b16 %v1218
        %v1291 = vunpack.c.h.b16 %v1218
        %v1292 = vunpack.c.l.b16 %v1219
        %v1293 = vunpack.c.h.b16 %v1219
        %v1294 = vunpack.c.l.b16 %v1220
        %v1295 = vunpack.c.h.b16 %v1220
        %v1296 = vunpack.c.l.b16 %v1221
        %v1297 = vunpack.c.h.b16 %v1221
        %v1298 = vunpack.c.l.b16 %v1222
        %v1299 = vunpack.c.h.b16 %v1222
        %v1300 = vunpack.c.l.b16 %v1223
        %v1301 = vunpack.c.h.b16 %v1223
        %v1302 = vunpack.c.l.b16 %v1224
        %v1303 = vunpack.c.h.b16 %v1224
        %v1304 = vunpack.c.l.b16 %v1225
        %v1305 = vunpack.c.h.b16 %v1225
        %v1306 = vunpack.c.l.b16 %v1226
        %v1307 = vunpack.c.h.b16 %v1226
        %v1308 = vunpack.c.l.b16 %v1227
        %v1309 = vunpack.c.h.b16 %v1227
        %v1310 = vunpack.c.l.b16 %v1228
        %v1311 = vunpack.c.h.b16 %v1228
        %v1312 = vunpack.c.l.b16 %v1229
        %v1313 = vunpack.c.h.b16 %v1229
        %v1314 = vunpack.c.l.b16 %v1230
        %v1315 = vunpack.c.h.b16 %v1230
        %v1316 = vunpack.c.l.b16 %v1231
        %v1317 = vunpack.c.h.b16 %v1231
        %v1318 = vunpack.c.l.b16 %v1232
        %v1319 = vunpack.c.h.b16 %v1232
        %v1320 = vunpack.c.l.b16 %v1233
        %v1321 = vunpack.c.h.b16 %v1233
        %v1322 = vunpack.c.l.b16 %v1234
        %v1323 = vunpack.c.h.b16 %v1234
        %v1324 = vunpack.c.l.b16 %v1235
        %v1325 = vunpack.c.h.b16 %v1235
        %v1326 = vunpack.c.l.b16 %v1236
        %v1327 = vunpack.c.h.b16 %v1236
        %v1328 = vunpack.c.l.b16 %v1237
        %v1329 = vunpack.c.h.b16 %v1237
        %v1330 = vunpack.c.l.b16 %v1238
        %v1331 = vunpack.c.h.b16 %v1238
        %v1332 = vunpack.c.l.b16 %v1239
        %v1333 = vunpack.c.h.b16 %v1239
        %v1334 = vunpack.c.l.b16 %v1240
        %v1335 = vunpack.c.h.b16 %v1240
        %v1336 = vunpack.c.l.b16 %v1241
        %v1337 = vunpack.c.h.b16 %v1241
        %v1338 = vunpack.c.l.b16 %v1242
        %v1339 = vunpack.c.h.b16 %v1242
        %v1340 = vunpack.c.l.b16 %v1243
        %v1341 = vunpack.c.h.b16 %v1243
        %v1342 = vunpack.c.l.b16 %v1244
        %v1343 = vunpack.c.h.b16 %v1244
        %v1344 = vunpack.c.l.b16 %v1245
        %v1345 = vunpack.c.h.b16 %v1245
        %v1346 = vunpack.c.l.b16 %v1246
        %v1347 = vunpack.c.h.b16 %v1246
        %v1348 = vunpack.c.l.b16 %v1247
        %v1349 = vunpack.c.h.b16 %v1247
        %v1350 = vunpack.c.l.b16 %v1248
        %v1351 = vunpack.c.h.b16 %v1248
        %v1352 = vunpack.c.l.b16 %v1249
        %v1353 = vunpack.c.h.b16 %v1249
        %v1354 = vpack.c.b16 %v1292, %v1290
        %v1355 = vpack.c.b16 %v1293, %v1291
        %v1356 = vpack.c.b16 %v1296, %v1294
        %v1357 = vpack.c.b16 %v1297, %v1295
        %v1358 = vpack.c.b16 %v1300, %v1298
        %v1359 = vpack.c.b16 %v1301, %v1299
        %v1360 = vpack.c.b16 %v1304, %v1302
        %v1361 = vpack.c.b16 %v1305, %v1303
        %v1362 = vpack.c.b16 %v1308, %v1306
        %v1363 = vpack.c.b16 %v1309, %v1307
        %v1364 = vpack.c.b16 %v1312, %v1310
        %v1365 = vpack.c.b16 %v1313, %v1311
        %v1366 = vpack.c.b16 %v1316, %v1314
        %v1367 = vpack.c.b16 %v1317, %v1315
        %v1368 = vpack.c.b16 %v1320, %v1318
        %v1369 = vpack.c.b16 %v1321, %v1319
        %v1370 = vpack.c.b16 %v1324, %v1322
        %v1371 = vpack.c.b16 %v1325, %v1323
        %v1372 = vpack.c.b16 %v1328, %v1326
        %v1373 = vpack.c.b16 %v1329, %v1327
        %v1374 = vpack.c.b16 %v1332, %v1330
        %v1375 = vpack.c.b16 %v1333, %v1331
        %v1376 = vpack.c.b16 %v1336, %v1334
        %v1377 = vpack.c.b16 %v1337, %v1335
        %v1378 = vpack.c.b16 %v1340, %v1338
        %v1379 = vpack.c.b16 %v1341, %v1339
        %v1380 = vpack.c.b16 %v1344, %v1342
        %v1381 = vpack.c.b16 %v1345, %v1343
        %v1382 = vpack.c.b16 %v1348, %v1346
        %v1383 = vpack.c.b16 %v1349, %v1347
        %v1384 = vpack.c.b16 %v1352, %v1350
        %v1385 = vpack.c.b16 %v1353, %v1351
        %1418 = vmatprep.subr.bf16.mxu0 %v1355
        %1419 = vmatpush1.bf16.msra.mxu0 %v1354
        %1420 = vmatprep.subr.bf16.mxu0 %v1357
        %1421 = vmatpush1.bf16.msra.mxu0 %v1356
        %1422 = vmatprep.subr.bf16.mxu0 %v1359
        %1423 = vmatpush1.bf16.msra.mxu0 %v1358
        %1424 = vmatprep.subr.bf16.mxu0 %v1361
        %1425 = vmatpush1.bf16.msra.mxu0 %v1360
        %1426 = vmatprep.subr.bf16.mxu0 %v1363
        %1427 = vmatpush1.bf16.msra.mxu0 %v1362
        %1428 = vmatprep.subr.bf16.mxu0 %v1365
        %1429 = vmatpush1.bf16.msra.mxu0 %v1364
        %1430 = vmatprep.subr.bf16.mxu0 %v1367
        %1431 = vmatpush1.bf16.msra.mxu0 %v1366
        %1432 = vmatprep.subr.bf16.mxu0 %v1369
        %1433 = vmatpush1.bf16.msra.mxu0 %v1368
        %1434 = vmatprep.subr.bf16.mxu0 %v1371
        %1435 = vmatpush1.bf16.msra.mxu0 %v1370
        %1436 = vmatprep.subr.bf16.mxu0 %v1373
        %1437 = vmatpush1.bf16.msra.mxu0 %v1372
        %1438 = vmatprep.subr.bf16.mxu0 %v1375
        %1439 = vmatpush1.bf16.msra.mxu0 %v1374
        %1440 = vmatprep.subr.bf16.mxu0 %v1377
        %1441 = vmatpush1.bf16.msra.mxu0 %v1376
        %1442 = vmatprep.subr.bf16.mxu0 %v1379
        %1443 = vmatpush1.bf16.msra.mxu0 %v1378
        %1444 = vmatprep.subr.bf16.mxu0 %v1381
        %1445 = vmatpush1.bf16.msra.mxu0 %v1380
        %1446 = vmatprep.subr.bf16.mxu0 %v1383
        %1447 = vmatpush1.bf16.msra.mxu0 %v1382
        %1448 = vmatprep.subr.bf16.mxu0 %v1385
        %1449 = vmatpush1.bf16.msra.mxu0 %v1384
        %1450 = vmatprep.mubr.bf16.mxu0 %v1203
        %1451 = vmatmul.mubr.bf16.gmra.mrb[0].mxu0 %v1202
        %v1452 = vpop.f32.mrb[0].mxu0
        %v1453 = vadd.f32 %v1253, %v1452
        %v1454 = vpop.f32.mrb[0].mxu0
        %v1455 = vadd.f32 %v1257, %v1454
        %v1456 = vpop.f32.mrb[0].mxu0
        %v1457 = vadd.f32 %v1253, %v1456
        %v1458 = vpop.f32.mrb[0].mxu0
        %v1459 = vadd.f32 %v1257, %v1458
        %1460 = vmatprep.mubr.bf16.mxu0 %v1205
        %1461 = vmatmul.mubr.bf16.gmra.mrb[0].mxu0 %v1204
        %v1462 = vpop.f32.mrb[0].mxu0
        %v1463 = vadd.f32 %v1253, %v1462
        %v1464 = vpop.f32.mrb[0].mxu0
        %v1465 = vadd.f32 %v1257, %v1464
        %v1466 = vpop.f32.mrb[0].mxu0
        %v1467 = vadd.f32 %v1253, %v1466
        %v1468 = vpop.f32.mrb[0].mxu0
        %v1469 = vadd.f32 %v1257, %v1468
        %1470 = vmatprep.mubr.bf16.mxu0 %v1207
        %1471 = vmatmul.mubr.bf16.gmra.mrb[0].mxu0 %v1206
        %v1472 = vpop.f32.mrb[0].mxu0
        %v1473 = vadd.f32 %v1253, %v1472
        %v1474 = vpop.f32.mrb[0].mxu0
        %v1475 = vadd.f32 %v1257, %v1474
        %v1476 = vpop.f32.mrb[0].mxu0
        %v1477 = vadd.f32 %v1253, %v1476
        %v1478 = vpop.f32.mrb[0].mxu0
        %v1479 = vadd.f32 %v1257, %v1478
        %1480 = vmatprep.mubr.bf16.mxu0 %v1209
        %1481 = vmatmul.mubr.bf16.gmra.mrb[0].mxu0 %v1208
        %v1482 = vpop.f32.mrb[0].mxu0
        %v1483 = vadd.f32 %v1253, %v1482
        %v1484 = vpop.f32.mrb[0].mxu0
        %v1485 = vadd.f32 %v1257, %v1484
        %v1486 = vpop.f32.mrb[0].mxu0
        %v1487 = vadd.f32 %v1253, %v1486
        %v1488 = vpop.f32.mrb[0].mxu0
        %v1489 = vadd.f32 %v1257, %v1488
        %1490 = vmatprep.mubr.bf16.mxu0 %v1211
        %1491 = vmatmul.mubr.bf16.gmra.mrb[0].mxu0 %v1210
        %v1492 = vpop.f32.mrb[0].mxu0
        %v1493 = vadd.f32 %v1253, %v1492
        %v1494 = vpop.f32.mrb[0].mxu0
        %v1495 = vadd.f32 %v1257, %v1494
        %v1496 = vpop.f32.mrb[0].mxu0
        %v1497 = vadd.f32 %v1253, %v1496
        %v1498 = vpop.f32.mrb[0].mxu0
        %v1499 = vadd.f32 %v1257, %v1498
        %1500 = vmatprep.mubr.bf16.mxu0 %v1213
        %1501 = vmatmul.mubr.bf16.gmra.mrb[0].mxu0 %v1212
        %v1502 = vpop.f32.mrb[0].mxu0
        %v1503 = vadd.f32 %v1253, %v1502
        %v1504 = vpop.f32.mrb[0].mxu0
        %v1505 = vadd.f32 %v1257, %v1504
        %v1506 = vpop.f32.mrb[0].mxu0
        %v1507 = vadd.f32 %v1253, %v1506
        %v1508 = vpop.f32.mrb[0].mxu0
        %v1509 = vadd.f32 %v1257, %v1508
        %1510 = vmatprep.mubr.bf16.mxu0 %v1215
        %1511 = vmatmul.mubr.bf16.gmra.mrb[0].mxu0 %v1214
        %v1512 = vpop.f32.mrb[0].mxu0
        %v1513 = vadd.f32 %v1253, %v1512
        %v1514 = vpop.f32.mrb[0].mxu0
        %v1515 = vadd.f32 %v1257, %v1514
        %v1516 = vpop.f32.mrb[0].mxu0
        %v1517 = vadd.f32 %v1253, %v1516
        %v1518 = vpop.f32.mrb[0].mxu0
        %v1519 = vadd.f32 %v1257, %v1518
        %1520 = vmatprep.mubr.bf16.mxu0 %v1217
        %1521 = vmatmul.mubr.bf16.gmra.mrb[0].mxu0 %v1216
        %v1522 = vpop.f32.mrb[0].mxu0
        %v1523 = vadd.f32 %v1253, %v1522
        %v1524 = vpop.f32.mrb[0].mxu0
        %v1525 = vadd.f32 %v1257, %v1524
        %v1526 = vpop.f32.mrb[0].mxu0
        %v1527 = vadd.f32 %v1253, %v1526
        %v1528 = vpop.f32.mrb[0].mxu0
        %v1529 = vadd.f32 %v1257, %v1528
        %1530 = vdwg.mxu0
        %v1531 = vadd.f32 %v1453, %v1455
        %1532 = vadd.xlane.f32.xlu0 %v1531
        %v1533 = vpop.xlane.xlu0 %1532
        %v1534 = vadd.f32 %v1457, %v1459
        %1535 = vadd.xlane.f32.xlu0 %v1534
        %v1536 = vpop.xlane.xlu0 %1535
        %v1537 = vadd.f32 %v1463, %v1465
        %1538 = vadd.xlane.f32.xlu0 %v1537
        %v1539 = vpop.xlane.xlu0 %1538
        %v1540 = vadd.f32 %v1467, %v1469
        %1541 = vadd.xlane.f32.xlu0 %v1540
        %v1542 = vpop.xlane.xlu0 %1541
        %v1543 = vadd.f32 %v1473, %v1475
        %1544 = vadd.xlane.f32.xlu0 %v1543
        %v1545 = vpop.xlane.xlu0 %1544
        %v1546 = vadd.f32 %v1477, %v1479
        %1547 = vadd.xlane.f32.xlu0 %v1546
        %v1548 = vpop.xlane.xlu0 %1547
        %v1549 = vadd.f32 %v1483, %v1485
        %1550 = vadd.xlane.f32.xlu0 %v1549
        %v1551 = vpop.xlane.xlu0 %1550
        %v1552 = vadd.f32 %v1487, %v1489
        %1553 = vadd.xlane.f32.xlu0 %v1552
        %v1554 = vpop.xlane.xlu0 %1553
        %v1555 = vadd.f32 %v1493, %v1495
        %1556 = vadd.xlane.f32.xlu0 %v1555
        %v1557 = vpop.xlane.xlu0 %1556
        %v1558 = vadd.f32 %v1497, %v1499
        %1559 = vadd.xlane.f32.xlu0 %v1558
        %v1560 = vpop.xlane.xlu0 %1559
        %v1561 = vadd.f32 %v1503, %v1505
        %1562 = vadd.xlane.f32.xlu0 %v1561
        %v1563 = vpop.xlane.xlu0 %1562
        %v1564 = vadd.f32 %v1507, %v1509
        %1565 = vadd.xlane.f32.xlu0 %v1564
        %v1566 = vpop.xlane.xlu0 %1565
        %v1567 = vadd.f32 %v1513, %v1515
        %1568 = vadd.xlane.f32.xlu0 %v1567
        %v1569 = vpop.xlane.xlu0 %1568
        %v1570 = vadd.f32 %v1517, %v1519
        %1571 = vadd.xlane.f32.xlu0 %v1570
        %v1572 = vpop.xlane.xlu0 %1571
        %v1573 = vadd.f32 %v1523, %v1525
        %1574 = vadd.xlane.f32.xlu0 %v1573
        %v1575 = vpop.xlane.xlu0 %1574
        %v1576 = vadd.f32 %v1527, %v1529
        %1577 = vadd.xlane.f32.xlu0 %v1576
        %v1578 = vpop.xlane.xlu0 %1577
        %v1579 = vmul.f32 %v1533, %v833
        %v1580 = vmul.f32 %v1536, %v833
        %v1581 = vmul.f32 %v1539, %v833
        %v1582 = vmul.f32 %v1542, %v833
        %v1583 = vmul.f32 %v1545, %v833
        %v1584 = vmul.f32 %v1548, %v833
        %v1585 = vmul.f32 %v1551, %v833
        %v1586 = vmul.f32 %v1554, %v833
        %v1587 = vmul.f32 %v1557, %v833
        %v1588 = vmul.f32 %v1560, %v833
        %v1589 = vmul.f32 %v1563, %v833
        %v1590 = vmul.f32 %v1566, %v833
        %v1591 = vmul.f32 %v1569, %v833
        %v1592 = vmul.f32 %v1572, %v833
        %v1593 = vmul.f32 %v1575, %v833
        %v1594 = vmul.f32 %v1578, %v833
        %v1595 = vmul.f32 %v1453, %v1453
        %v1596 = vmul.f32 %v1455, %v1455
        %v1597 = vmul.f32 %v1457, %v1457
        %v1598 = vmul.f32 %v1459, %v1459
        %v1599 = vmul.f32 %v1463, %v1463
        %v1600 = vmul.f32 %v1465, %v1465
        %v1601 = vmul.f32 %v1467, %v1467
        %v1602 = vmul.f32 %v1469, %v1469
        %v1603 = vmul.f32 %v1473, %v1473
        %v1604 = vmul.f32 %v1475, %v1475
        %v1605 = vmul.f32 %v1477, %v1477
        %v1606 = vmul.f32 %v1479, %v1479
        %v1607 = vmul.f32 %v1483, %v1483
        %v1608 = vmul.f32 %v1485, %v1485
        %v1609 = vmul.f32 %v1487, %v1487
        %v1610 = vmul.f32 %v1489, %v1489
        %v1611 = vmul.f32 %v1493, %v1493
        %v1612 = vmul.f32 %v1495, %v1495
        %v1613 = vmul.f32 %v1497, %v1497
        %v1614 = vmul.f32 %v1499, %v1499
        %v1615 = vmul.f32 %v1503, %v1503
        %v1616 = vmul.f32 %v1505, %v1505
        %v1617 = vmul.f32 %v1507, %v1507
        %v1618 = vmul.f32 %v1509, %v1509
        %v1619 = vmul.f32 %v1513, %v1513
        %v1620 = vmul.f32 %v1515, %v1515
        %v1621 = vmul.f32 %v1517, %v1517
        %v1622 = vmul.f32 %v1519, %v1519
        %v1623 = vmul.f32 %v1523, %v1523
        %v1624 = vmul.f32 %v1525, %v1525
        %v1625 = vmul.f32 %v1527, %v1527
        %v1626 = vmul.f32 %v1529, %v1529
        %v1627 = vadd.f32 %v1595, %v1596
        %1628 = vadd.xlane.f32.xlu0 %v1627
        %v1629 = vpop.xlane.xlu0 %1628
        %v1630 = vadd.f32 %v1597, %v1598
        %1631 = vadd.xlane.f32.xlu0 %v1630
        %v1632 = vpop.xlane.xlu0 %1631
        %v1633 = vadd.f32 %v1599, %v1600
        %1634 = vadd.xlane.f32.xlu0 %v1633
        %v1635 = vpop.xlane.xlu0 %1634
        %v1636 = vadd.f32 %v1601, %v1602
        %1637 = vadd.xlane.f32.xlu0 %v1636
        %v1638 = vpop.xlane.xlu0 %1637
        %v1639 = vadd.f32 %v1603, %v1604
        %1640 = vadd.xlane.f32.xlu0 %v1639
        %v1641 = vpop.xlane.xlu0 %1640
        %v1642 = vadd.f32 %v1605, %v1606
        %1643 = vadd.xlane.f32.xlu0 %v1642
        %v1644 = vpop.xlane.xlu0 %1643
        %v1645 = vadd.f32 %v1607, %v1608
        %1646 = vadd.xlane.f32.xlu0 %v1645
        %v1647 = vpop.xlane.xlu0 %1646
        %v1648 = vadd.f32 %v1609, %v1610
        %1649 = vadd.xlane.f32.xlu0 %v1648
        %v1650 = vpop.xlane.xlu0 %1649
        %v1651 = vadd.f32 %v1611, %v1612
        %1652 = vadd.xlane.f32.xlu0 %v1651
        %v1653 = vpop.xlane.xlu0 %1652
        %v1654 = vadd.f32 %v1613, %v1614
        %1655 = vadd.xlane.f32.xlu0 %v1654
        %v1656 = vpop.xlane.xlu0 %1655
        %v1657 = vadd.f32 %v1615, %v1616
        %1658 = vadd.xlane.f32.xlu0 %v1657
        %v1659 = vpop.xlane.xlu0 %1658
        %v1660 = vadd.f32 %v1617, %v1618
        %1661 = vadd.xlane.f32.xlu0 %v1660
        %v1662 = vpop.xlane.xlu0 %1661
        %v1663 = vadd.f32 %v1619, %v1620
        %1664 = vadd.xlane.f32.xlu0 %v1663
        %v1665 = vpop.xlane.xlu0 %1664
        %v1666 = vadd.f32 %v1621, %v1622
        %1667 = vadd.xlane.f32.xlu0 %v1666
        %v1668 = vpop.xlane.xlu0 %1667
        %v1669 = vadd.f32 %v1623, %v1624
        %1670 = vadd.xlane.f32.xlu0 %v1669
        %v1671 = vpop.xlane.xlu0 %1670
        %v1672 = vadd.f32 %v1625, %v1626
        %1673 = vadd.xlane.f32.xlu0 %v1672
        %v1674 = vpop.xlane.xlu0 %1673
        %v1675 = vmul.f32 %v1629, %v833
        %v1676 = vmul.f32 %v1632, %v833
        %v1677 = vmul.f32 %v1635, %v833
        %v1678 = vmul.f32 %v1638, %v833
        %v1679 = vmul.f32 %v1641, %v833
        %v1680 = vmul.f32 %v1644, %v833
        %v1681 = vmul.f32 %v1647, %v833
        %v1682 = vmul.f32 %v1650, %v833
        %v1683 = vmul.f32 %v1653, %v833
        %v1684 = vmul.f32 %v1656, %v833
        %v1685 = vmul.f32 %v1659, %v833
        %v1686 = vmul.f32 %v1662, %v833
        %v1687 = vmul.f32 %v1665, %v833
        %v1688 = vmul.f32 %v1668, %v833
        %v1689 = vmul.f32 %v1671, %v833
        %v1690 = vmul.f32 %v1674, %v833
        %v1691 = vmul.f32 %v1579, %v1579
        %v1692 = vmul.f32 %v1580, %v1580
        %v1693 = vmul.f32 %v1581, %v1581
        %v1694 = vmul.f32 %v1582, %v1582
        %v1695 = vmul.f32 %v1583, %v1583
        %v1696 = vmul.f32 %v1584, %v1584
        %v1697 = vmul.f32 %v1585, %v1585
        %v1698 = vmul.f32 %v1586, %v1586
        %v1699 = vmul.f32 %v1587, %v1587
        %v1700 = vmul.f32 %v1588, %v1588
        %v1701 = vmul.f32 %v1589, %v1589
        %v1702 = vmul.f32 %v1590, %v1590
        %v1703 = vmul.f32 %v1591, %v1591
        %v1704 = vmul.f32 %v1592, %v1592
        %v1705 = vmul.f32 %v1593, %v1593
        %v1706 = vmul.f32 %v1594, %v1594
        %v1707 = vsub.f32 %v1675, %v1691
        %v1708 = vsub.f32 %v1676, %v1692
        %v1709 = vsub.f32 %v1677, %v1693
        %v1710 = vsub.f32 %v1678, %v1694
        %v1711 = vsub.f32 %v1679, %v1695
        %v1712 = vsub.f32 %v1680, %v1696
        %v1713 = vsub.f32 %v1681, %v1697
        %v1714 = vsub.f32 %v1682, %v1698
        %v1715 = vsub.f32 %v1683, %v1699
        %v1716 = vsub.f32 %v1684, %v1700
        %v1717 = vsub.f32 %v1685, %v1701
        %v1718 = vsub.f32 %v1686, %v1702
        %v1719 = vsub.f32 %v1687, %v1703
        %v1720 = vsub.f32 %v1688, %v1704
        %v1721 = vsub.f32 %v1689, %v1705
        %v1722 = vsub.f32 %v1690, %v1706
        %v1723 = vmax.f32 %v1707, 0.0
        %v1724 = vmax.f32 %v1708, 0.0
        %v1725 = vmax.f32 %v1709, 0.0
        %v1726 = vmax.f32 %v1710, 0.0
        %v1727 = vmax.f32 %v1711, 0.0
        %v1728 = vmax.f32 %v1712, 0.0
        %v1729 = vmax.f32 %v1713, 0.0
        %v1730 = vmax.f32 %v1714, 0.0
        %v1731 = vmax.f32 %v1715, 0.0
        %v1732 = vmax.f32 %v1716, 0.0
        %v1733 = vmax.f32 %v1717, 0.0
        %v1734 = vmax.f32 %v1718, 0.0
        %v1735 = vmax.f32 %v1719, 0.0
        %v1736 = vmax.f32 %v1720, 0.0
        %v1737 = vmax.f32 %v1721, 0.0
        %v1738 = vmax.f32 %v1722, 0.0
        %v1739 = vsub.f32 %v1453, %v1579
        %v1740 = vsub.f32 %v1455, %v1579
        %v1741 = vsub.f32 %v1457, %v1580
        %v1742 = vsub.f32 %v1459, %v1580
        %v1743 = vsub.f32 %v1463, %v1581
        %v1744 = vsub.f32 %v1465, %v1581
        %v1745 = vsub.f32 %v1467, %v1582
        %v1746 = vsub.f32 %v1469, %v1582
        %v1747 = vsub.f32 %v1473, %v1583
        %v1748 = vsub.f32 %v1475, %v1583
        %v1749 = vsub.f32 %v1477, %v1584
        %v1750 = vsub.f32 %v1479, %v1584
        %v1751 = vsub.f32 %v1483, %v1585
        %v1752 = vsub.f32 %v1485, %v1585
        %v1753 = vsub.f32 %v1487, %v1586
        %v1754 = vsub.f32 %v1489, %v1586
        %v1755 = vsub.f32 %v1493, %v1587
        %v1756 = vsub.f32 %v1495, %v1587
        %v1757 = vsub.f32 %v1497, %v1588
        %v1758 = vsub.f32 %v1499, %v1588
        %v1759 = vsub.f32 %v1503, %v1589
        %v1760 = vsub.f32 %v1505, %v1589
        %v1761 = vsub.f32 %v1507, %v1590
        %v1762 = vsub.f32 %v1509, %v1590
        %v1763 = vsub.f32 %v1513, %v1591
        %v1764 = vsub.f32 %v1515, %v1591
        %v1765 = vsub.f32 %v1517, %v1592
        %v1766 = vsub.f32 %v1519, %v1592
        %v1767 = vsub.f32 %v1523, %v1593
        %v1768 = vsub.f32 %v1525, %v1593
        %v1769 = vsub.f32 %v1527, %v1594
        %v1770 = vsub.f32 %v1529, %v1594
        %v1771 = vadd.f32 %v1723, 1e-05
        %v1772 = vadd.f32 %v1724, 1e-05
        %v1773 = vadd.f32 %v1725, 1e-05
        %v1774 = vadd.f32 %v1726, 1e-05
        %v1775 = vadd.f32 %v1727, 1e-05
        %v1776 = vadd.f32 %v1728, 1e-05
        %v1777 = vadd.f32 %v1729, 1e-05
        %v1778 = vadd.f32 %v1730, 1e-05
        %v1779 = vadd.f32 %v1731, 1e-05
        %v1780 = vadd.f32 %v1732, 1e-05
        %v1781 = vadd.f32 %v1733, 1e-05
        %v1782 = vadd.f32 %v1734, 1e-05
        %v1783 = vadd.f32 %v1735, 1e-05
        %v1784 = vadd.f32 %v1736, 1e-05
        %v1785 = vadd.f32 %v1737, 1e-05
        %v1786 = vadd.f32 %v1738, 1e-05
        %v1787 = vrsqrt.pop %v1771
        %v1788 = vrsqrt.pop %v1772
        %v1789 = vrsqrt.pop %v1773
        %v1790 = vrsqrt.pop %v1774
        %v1791 = vrsqrt.pop %v1775
        %v1792 = vrsqrt.pop %v1776
        %v1793 = vrsqrt.pop %v1777
        %v1794 = vrsqrt.pop %v1778
        %v1795 = vrsqrt.pop %v1779
        %v1796 = vrsqrt.pop %v1780
        %v1797 = vrsqrt.pop %v1781
        %v1798 = vrsqrt.pop %v1782
        %v1799 = vrsqrt.pop %v1783
        %v1800 = vrsqrt.pop %v1784
        %v1801 = vrsqrt.pop %v1785
        %v1802 = vrsqrt.pop %v1786
        %v1803 = vmul.f32 %v1739, %v1787
        %v1804 = vmul.f32 %v1740, %v1787
        %v1805 = vmul.f32 %v1741, %v1788
        %v1806 = vmul.f32 %v1742, %v1788
        %v1807 = vmul.f32 %v1743, %v1789
        %v1808 = vmul.f32 %v1744, %v1789
        %v1809 = vmul.f32 %v1745, %v1790
        %v1810 = vmul.f32 %v1746, %v1790
        %v1811 = vmul.f32 %v1747, %v1791
        %v1812 = vmul.f32 %v1748, %v1791
        %v1813 = vmul.f32 %v1749, %v1792
        %v1814 = vmul.f32 %v1750, %v1792
        %v1815 = vmul.f32 %v1751, %v1793
        %v1816 = vmul.f32 %v1752, %v1793
        %v1817 = vmul.f32 %v1753, %v1794
        %v1818 = vmul.f32 %v1754, %v1794
        %v1819 = vmul.f32 %v1755, %v1795
        %v1820 = vmul.f32 %v1756, %v1795
        %v1821 = vmul.f32 %v1757, %v1796
        %v1822 = vmul.f32 %v1758, %v1796
        %v1823 = vmul.f32 %v1759, %v1797
        %v1824 = vmul.f32 %v1760, %v1797
        %v1825 = vmul.f32 %v1761, %v1798
        %v1826 = vmul.f32 %v1762, %v1798
        %v1827 = vmul.f32 %v1763, %v1799
        %v1828 = vmul.f32 %v1764, %v1799
        %v1829 = vmul.f32 %v1765, %v1800
        %v1830 = vmul.f32 %v1766, %v1800
        %v1831 = vmul.f32 %v1767, %v1801
        %v1832 = vmul.f32 %v1768, %v1801
        %v1833 = vmul.f32 %v1769, %v1802
        %v1834 = vmul.f32 %v1770, %v1802
        %v1835 = vlaneseq
        %v1836 = vshrl.u32 %v1835, 7
        %v1837 = vsub.s32 4, %v1836
        %v1838 = vrot.slane %v261, %v1837
        %v1839 = vlaneseq
        %v1840 = vshrl.u32 %v1839, 7
        %v1841 = vsub.s32 4, %v1840
        %v1842 = vrot.slane %v262, %v1841
        %v1843 = vmul.f32 %v1803, %v1838
        %v1844 = vmul.f32 %v1804, %v1842
        %v1845 = vmul.f32 %v1805, %v1838
        %v1846 = vmul.f32 %v1806, %v1842
        %v1847 = vmul.f32 %v1807, %v1838
        %v1848 = vmul.f32 %v1808, %v1842
        %v1849 = vmul.f32 %v1809, %v1838
        %v1850 = vmul.f32 %v1810, %v1842
        %v1851 = vmul.f32 %v1811, %v1838
        %v1852 = vmul.f32 %v1812, %v1842
        %v1853 = vmul.f32 %v1813, %v1838
        %v1854 = vmul.f32 %v1814, %v1842
        %v1855 = vmul.f32 %v1815, %v1838
        %v1856 = vmul.f32 %v1816, %v1842
        %v1857 = vmul.f32 %v1817, %v1838
        %v1858 = vmul.f32 %v1818, %v1842
        %v1859 = vmul.f32 %v1819, %v1838
        %v1860 = vmul.f32 %v1820, %v1842
        %v1861 = vmul.f32 %v1821, %v1838
        %v1862 = vmul.f32 %v1822, %v1842
        %v1863 = vmul.f32 %v1823, %v1838
        %v1864 = vmul.f32 %v1824, %v1842
        %v1865 = vmul.f32 %v1825, %v1838
        %v1866 = vmul.f32 %v1826, %v1842
        %v1867 = vmul.f32 %v1827, %v1838
        %v1868 = vmul.f32 %v1828, %v1842
        %v1869 = vmul.f32 %v1829, %v1838
        %v1870 = vmul.f32 %v1830, %v1842
        %v1871 = vmul.f32 %v1831, %v1838
        %v1872 = vmul.f32 %v1832, %v1842
        %v1873 = vmul.f32 %v1833, %v1838
        %v1874 = vmul.f32 %v1834, %v1842
        %v1875 = vlaneseq
        %v1876 = vshrl.u32 %v1875, 7
        %v1877 = vsub.s32 5, %v1876
        %v1878 = vrot.slane %v261, %v1877
        %v1879 = vlaneseq
        %v1880 = vshrl.u32 %v1879, 7
        %v1881 = vsub.s32 5, %v1880
        %v1882 = vrot.slane %v262, %v1881
        %v1883 = vadd.f32 %v1843, %v1878
        %v1884 = vadd.f32 %v1844, %v1882
        %v1885 = vadd.f32 %v1845, %v1878
        %v1886 = vadd.f32 %v1846, %v1882
        %v1887 = vadd.f32 %v1847, %v1878
        %v1888 = vadd.f32 %v1848, %v1882
        %v1889 = vadd.f32 %v1849, %v1878
        %v1890 = vadd.f32 %v1850, %v1882
        %v1891 = vadd.f32 %v1851, %v1878
        %v1892 = vadd.f32 %v1852, %v1882
        %v1893 = vadd.f32 %v1853, %v1878
        %v1894 = vadd.f32 %v1854, %v1882
        %v1895 = vadd.f32 %v1855, %v1878
        %v1896 = vadd.f32 %v1856, %v1882
        %v1897 = vadd.f32 %v1857, %v1878
        %v1898 = vadd.f32 %v1858, %v1882
        %v1899 = vadd.f32 %v1859, %v1878
        %v1900 = vadd.f32 %v1860, %v1882
        %v1901 = vadd.f32 %v1861, %v1878
        %v1902 = vadd.f32 %v1862, %v1882
        %v1903 = vadd.f32 %v1863, %v1878
        %v1904 = vadd.f32 %v1864, %v1882
        %v1905 = vadd.f32 %v1865, %v1878
        %v1906 = vadd.f32 %v1866, %v1882
        %v1907 = vadd.f32 %v1867, %v1878
        %v1908 = vadd.f32 %v1868, %v1882
        %v1909 = vadd.f32 %v1869, %v1878
        %v1910 = vadd.f32 %v1870, %v1882
        %v1911 = vadd.f32 %v1871, %v1878
        %v1912 = vadd.f32 %v1872, %v1882
        %v1913 = vadd.f32 %v1873, %v1878
        %v1914 = vadd.f32 %v1874, %v1882
        %v1915 = vadd.f32 %v1883, %v713
        %v1916 = vadd.f32 %v1884, %v714
        %v1917 = vadd.f32 %v1885, %v715
        %v1918 = vadd.f32 %v1886, %v716
        %v1919 = vadd.f32 %v1887, %v717
        %v1920 = vadd.f32 %v1888, %v718
        %v1921 = vadd.f32 %v1889, %v719
        %v1922 = vadd.f32 %v1890, %v720
        %v1923 = vadd.f32 %v1891, %v721
        %v1924 = vadd.f32 %v1892, %v722
        %v1925 = vadd.f32 %v1893, %v723
        %v1926 = vadd.f32 %v1894, %v724
        %v1927 = vadd.f32 %v1895, %v725
        %v1928 = vadd.f32 %v1896, %v726
        %v1929 = vadd.f32 %v1897, %v727
        %v1930 = vadd.f32 %v1898, %v728
        %v1931 = vadd.f32 %v1899, %v729
        %v1932 = vadd.f32 %v1900, %v730
        %v1933 = vadd.f32 %v1901, %v731
        %v1934 = vadd.f32 %v1902, %v732
        %v1935 = vadd.f32 %v1903, %v733
        %v1936 = vadd.f32 %v1904, %v734
        %v1937 = vadd.f32 %v1905, %v735
        %v1938 = vadd.f32 %v1906, %v736
        %v1939 = vadd.f32 %v1907, %v737
        %v1940 = vadd.f32 %v1908, %v738
        %v1941 = vadd.f32 %v1909, %v739
        %v1942 = vadd.f32 %v1910, %v740
        %v1943 = vadd.f32 %v1911, %v741
        %v1944 = vadd.f32 %v1912, %v742
        %v1945 = vadd.f32 %v1913, %v743
        %v1946 = vadd.f32 %v1914, %v744
        %v1947 = vmax.f32 %v1915, 0.0
        %v1948 = vmax.f32 %v1916, 0.0
        %v1949 = vmax.f32 %v1917, 0.0
        %v1950 = vmax.f32 %v1918, 0.0
        %v1951 = vmax.f32 %v1919, 0.0
        %v1952 = vmax.f32 %v1920, 0.0
        %v1953 = vmax.f32 %v1921, 0.0
        %v1954 = vmax.f32 %v1922, 0.0
        %v1955 = vmax.f32 %v1923, 0.0
        %v1956 = vmax.f32 %v1924, 0.0
        %v1957 = vmax.f32 %v1925, 0.0
        %v1958 = vmax.f32 %v1926, 0.0
        %v1959 = vmax.f32 %v1927, 0.0
        %v1960 = vmax.f32 %v1928, 0.0
        %v1961 = vmax.f32 %v1929, 0.0
        %v1962 = vmax.f32 %v1930, 0.0
        %v1963 = vmax.f32 %v1931, 0.0
        %v1964 = vmax.f32 %v1932, 0.0
        %v1965 = vmax.f32 %v1933, 0.0
        %v1966 = vmax.f32 %v1934, 0.0
        %v1967 = vmax.f32 %v1935, 0.0
        %v1968 = vmax.f32 %v1936, 0.0
        %v1969 = vmax.f32 %v1937, 0.0
        %v1970 = vmax.f32 %v1938, 0.0
        %v1971 = vmax.f32 %v1939, 0.0
        %v1972 = vmax.f32 %v1940, 0.0
        %v1973 = vmax.f32 %v1941, 0.0
        %v1974 = vmax.f32 %v1942, 0.0
        %v1975 = vmax.f32 %v1943, 0.0
        %v1976 = vmax.f32 %v1944, 0.0
        %v1977 = vmax.f32 %v1945, 0.0
        %v1978 = vmax.f32 %v1946, 0.0
        %v1979 = vpack.c.bf16 %v1949, %v1947
        %v1980 = vpack.c.bf16 %v1950, %v1948
        %v1981 = vpack.c.bf16 %v1953, %v1951
        %v1982 = vpack.c.bf16 %v1954, %v1952
        %v1983 = vpack.c.bf16 %v1957, %v1955
        %v1984 = vpack.c.bf16 %v1958, %v1956
        %v1985 = vpack.c.bf16 %v1961, %v1959
        %v1986 = vpack.c.bf16 %v1962, %v1960
        %v1987 = vpack.c.bf16 %v1965, %v1963
        %v1988 = vpack.c.bf16 %v1966, %v1964
        %v1989 = vpack.c.bf16 %v1969, %v1967
        %v1990 = vpack.c.bf16 %v1970, %v1968
        %v1991 = vpack.c.bf16 %v1973, %v1971
        %v1992 = vpack.c.bf16 %v1974, %v1972
        %v1993 = vpack.c.bf16 %v1977, %v1975
        %v1994 = vpack.c.bf16 %v1978, %v1976
        %v2011 = vunpack.c.l.b16 %v1979
        %v2012 = vunpack.c.l.b16 %v1980
        %v2013 = vunpack.c.h.b16 %v1979
        %v2014 = vunpack.c.h.b16 %v1980
        %v2015 = vunpack.c.l.b16 %v1981
        %v2016 = vunpack.c.l.b16 %v1982
        %v2017 = vunpack.c.h.b16 %v1981
        %v2018 = vunpack.c.h.b16 %v1982
        %v2019 = vunpack.c.l.b16 %v1983
        %v2020 = vunpack.c.l.b16 %v1984
        %v2021 = vunpack.c.h.b16 %v1983
        %v2022 = vunpack.c.h.b16 %v1984
        %v2023 = vunpack.c.l.b16 %v1985
        %v2024 = vunpack.c.l.b16 %v1986
        %v2025 = vunpack.c.h.b16 %v1985
        %v2026 = vunpack.c.h.b16 %v1986
        %v2027 = vunpack.c.l.b16 %v1987
        %v2028 = vunpack.c.l.b16 %v1988
        %v2029 = vunpack.c.h.b16 %v1987
        %v2030 = vunpack.c.h.b16 %v1988
        %v2031 = vunpack.c.l.b16 %v1989
        %v2032 = vunpack.c.l.b16 %v1990
        %v2033 = vunpack.c.h.b16 %v1989
        %v2034 = vunpack.c.h.b16 %v1990
        %v2035 = vunpack.c.l.b16 %v1991
        %v2036 = vunpack.c.l.b16 %v1992
        %v2037 = vunpack.c.h.b16 %v1991
        %v2038 = vunpack.c.h.b16 %v1992
        %v2039 = vunpack.c.l.b16 %v1993
        %v2040 = vunpack.c.l.b16 %v1994
        %v2041 = vunpack.c.h.b16 %v1993
        %v2042 = vunpack.c.h.b16 %v1994
        %v2043 = vpack.c.b16 %v2012, %v2011
        %v2044 = vpack.c.b16 %v2014, %v2013
        %v2045 = vpack.c.b16 %v2016, %v2015
        %v2046 = vpack.c.b16 %v2018, %v2017
        %v2047 = vpack.c.b16 %v2020, %v2019
        %v2048 = vpack.c.b16 %v2022, %v2021
        %v2049 = vpack.c.b16 %v2024, %v2023
        %v2050 = vpack.c.b16 %v2026, %v2025
        %v2051 = vpack.c.b16 %v2028, %v2027
        %v2052 = vpack.c.b16 %v2030, %v2029
        %v2053 = vpack.c.b16 %v2032, %v2031
        %v2054 = vpack.c.b16 %v2034, %v2033
        %v2055 = vpack.c.b16 %v2036, %v2035
        %v2056 = vpack.c.b16 %v2038, %v2037
        %v2057 = vpack.c.b16 %v2040, %v2039
        %v2058 = vpack.c.b16 %v2042, %v2041
        %2075 = vst [vmem:[%s257] sm:$0xff] %v2043
        %2076 = vst [vmem:[%s257 + $0x8] sm:$0xff] %v2044
        %2077 = vst [vmem:[%s257 + $0x10] sm:$0xff] %v2045
        %2078 = vst [vmem:[%s257 + $0x18] sm:$0xff] %v2046
        %2079 = vst [vmem:[%s257 + $0x20] sm:$0xff] %v2047
        %2080 = vst [vmem:[%s257 + $0x28] sm:$0xff] %v2048
        %2081 = vst [vmem:[%s257 + $0x30] sm:$0xff] %v2049
        %2082 = vst [vmem:[%s257 + $0x38] sm:$0xff] %v2050
        %2083 = vst [vmem:[%s257 + $0x40] sm:$0xff] %v2051
        %2084 = vst [vmem:[%s257 + $0x48] sm:$0xff] %v2052
        %2085 = vst [vmem:[%s257 + $0x50] sm:$0xff] %v2053
        %2086 = vst [vmem:[%s257 + $0x58] sm:$0xff] %v2054
        %2087 = vst [vmem:[%s257 + $0x60] sm:$0xff] %v2055
        %2088 = vst [vmem:[%s257 + $0x68] sm:$0xff] %v2056
        %2089 = vst [vmem:[%s257 + $0x70] sm:$0xff] %v2057
        %2090 = vst [vmem:[%s257 + $0x78] sm:$0xff] %v2058
        %s2091 = sand.u32 %s120, 1
        %s2092 = scalar_lea.sflag [#allocation4], %s2091
        %s2093 = sand.u32 %s120, 1
        %s2094 = smul.addr %s2093, 128
        %s2095 = scalar_lea.vmem [#allocation10], %s2094
        // Predicated region
        $region53: #{tpu_custom_call.1} parent=35 // pred_check
          %p2096 = pneg %p130
        $region54: #{tpu_custom_call.1} parent=35 // pred_check_branch
          %2098 = sbr.rel (%p2096) target = $region56
        $region55: #{tpu_custom_call.1} parent=35 // pred_region
          %s2099 = smul.u32 16, %s23
          %s2101 = ssub.s32 2048, 2048
          %2102 = vsyncadd %s2092, %s2101
          %s2103 = smul.addr %s2099, 2
          %s2104 = smul.addr %s2103, 64
          %s2105 = scalar_lea.hbm %s4, %s2104
          %s2106 = sshll.u32 %s2095, 4
          %s2107 = int_to_ptr.vmem [resolvable:$true] %s2106
          %2112 = dma.vmem_to_hbm [thread:$0]  %s2107, 2048, %s2105, %s2092, 128, 128, 8
        $region56: #{tpu_custom_call.1} parent=35 // pred_fallthru
          _
      $region36: #{tpu_custom_call.1} parent=5 // pred_fallthru
        _
      %p2113 = scmp.le.s32.totalorder 2, %s18
      // Predicated region
      $region57: #{tpu_custom_call.1} parent=5 // pred_check
        %p2114 = pneg %p2113
      $region58: #{tpu_custom_call.1} parent=5 // pred_check_branch
        %2116 = sbr.rel (%p2114) target = $region60
      $region59: #{tpu_custom_call.1} parent=5 // pred_region
        %s2117 = ssub.s32 %s18, 2
        // Predicated region
        $region61: #{tpu_custom_call.1} parent=59 // pred_check
          %p2118 = pneg %p136
        $region62: #{tpu_custom_call.1} parent=59 // pred_check_branch
          %2120 = sbr.rel (%p2118) target = $region64
        $region63: #{tpu_custom_call.1} parent=59 // pred_region
          %s2121 = sand.u32 %s121, 1
          %s2122 = scalar_lea.sflag [#allocation4], %s2121
          %s2123 = sand.u32 %s121, 1
          %s2124 = smul.addr %s2123, 128
          %s2125 = scalar_lea.vmem [#allocation10], %s2124
          %2126 = dma.done %s2122, 2048
        $region64: #{tpu_custom_call.1} parent=59 // pred_fallthru
          _
      $region60: #{tpu_custom_call.1} parent=5 // pred_fallthru
        _
    $region6: #{tpu_custom_call.1} parent=1 // loop_footer
      %s22 = sadd.s32 1, %s18
    $region7: #{tpu_custom_call.1} parent=1 // loop_footer_branch
      %17 = sbr.rel target = $region3
    $region8: #{tpu_custom_call.1} parent=1 // loop_exit
      _
    %2127 = vsyncpa [#allocation3], 1
    %s2128 = scalar_lea.sflag [#allocation3], 1
    %2129 = vsyncpa %s2128, 1
    %2130 = vsyncpa [#allocation6], 1
    %2131 = vsyncpa [#allocation9], 1
    %2132 = vsyncpa [#allocation4], 1
    %s2133 = scalar_lea.sflag [#allocation4], 1
    %2134 = vsyncpa %s2133, 1

</llo_original>
